<compile_context>
chip_gen: v7x
topology: tpu7x:2x2x1
jax: 0.10.0
libtpu: 0.0.40
codegen_flags: <defaults>
</compile_context>

<pallas_src>
import jax
import jax.numpy as jnp
from jax.experimental import pallas as pl
from jax.experimental.pallas import tpu as pltpu


# --------------------------------------------------------------------------- kernels


def _edge_conv_center_kernel(xc_ref, xj_ref, wd_ref, w2_ref, b_ref, o_ref,
                             acc_ref, xi_ref):
    """Fast path: edge_index[1] is the identity center index.

    x_i term (x_center @ (W1 - W2) + bias) is computed once per N-tile; the K loop only
    accumulates max_k(x_j @ W2). Bias + ReLU are applied in the epilogue.
    """
    ks = pl.program_id(2)

    @pl.when(ks == 0)
    def _():
        xi_ref[...] = (jnp.dot(xc_ref[0], wd_ref[...],
                               preferred_element_type=jnp.float32)
                       + b_ref[...])

    blk = xj_ref[0]                                      # (Kb, tile_n, C)
    kb, tn, c = blk.shape
    h = jnp.dot(blk.reshape(kb * tn, c), w2_ref[...],
                preferred_element_type=jnp.float32)      # (Kb*tile_n, Cp)
    h = h.reshape(kb, tn, h.shape[-1])
    m = h[0]
    for i in range(1, kb):                               # Kb is static, <= 8
        m = jnp.maximum(m, h[i])

    @pl.when(ks == 0)
    def _():
        acc_ref[...] = m                                 # seed accumulator directly

    @pl.when(ks > 0)
    def _():
        acc_ref[...] = jnp.maximum(acc_ref[...], m)

    @pl.when(ks == pl.num_programs(2) - 1)
    def _():
        o_ref[0] = jnp.maximum(acc_ref[...] + xi_ref[...], 0.0).astype(o_ref.dtype)


def _edge_conv_general_kernel(xi_ref, xj_ref, wd_ref, w2_ref, b_ref, o_ref,
                              acc_ref):
    """General path: arbitrary edge_index[1]; x_i gathered per edge, still no concat."""
    ks = pl.program_id(2)

    xi = xi_ref[0]                                       # (Kb, tile_n, C)
    xj = xj_ref[0]
    kb, tn, c = xj.shape
    h = (jnp.dot(xi.reshape(kb * tn, c), wd_ref[...],
                 preferred_element_type=jnp.float32)
         + jnp.dot(xj.reshape(kb * tn, c), w2_ref[...],
                   preferred_element_type=jnp.float32))  # (Kb*tile_n, Cp)
    h = h.reshape(kb, tn, h.shape[-1])
    m = h[0]
    for i in range(1, kb):
        m = jnp.maximum(m, h[i])

    @pl.when(ks == 0)
    def _():
        acc_ref[...] = m

    @pl.when(ks > 0)
    def _():
        acc_ref[...] = jnp.maximum(acc_ref[...], m)

    @pl.when(ks == pl.num_programs(2) - 1)
    def _():
        o_ref[0] = jnp.maximum(acc_ref[...] + b_ref[...], 0.0).astype(o_ref.dtype)


# --------------------------------------------------------------------------- tiling


def _vmem_capacity_bytes():
    try:
        return int(pltpu.get_tpu_info().vmem_capacity_bytes)
    except Exception:
        return 64 * 1024 * 1024  # conservative (v7x-sized) default


def _select_tiling(N, K, B, C, Cp, in_isz, out_isz, budget, sub_mult, center,
                   tile_n=None, block_k=None):
    """Pick (tile_n, Kb) so the real per-step VMEM footprint fits the budget."""

    def footprint(tn, kb):
        gathered = 2 * kb * tn * C * in_isz              # x_j, double-buffered
        if center:
            gathered += 2 * tn * C * in_isz              # resident center rows
        else:
            gathered += 2 * kb * tn * C * in_isz         # x_i, double-buffered
        weights = 2 * C * Cp * in_isz + Cp * 4           # single-buffered invariants
        out = 2 * tn * Cp * out_isz
        scratch = (2 if center else 1) * tn * Cp * 4
        return gathered + weights + out + scratch

    if block_k is None:
        kb_cands = sorted((d for d in range(1, min(K, 8) + 1) if K % d == 0),
                          reverse=True)
    else:
        if K % block_k:
            raise ValueError("block_k must divide K")
        kb_cands = [int(block_k)]

    if tile_n is None:
        tn_cands = sorted({t for t in range(sub_mult, min(N, 1024) + 1, sub_mult)
                           if N % t == 0} | {N}, reverse=True)
    else:
        if N % tile_n:
            raise ValueError("tile_n must divide N")
        tn_cands = [int(tile_n)]

    for kb in kb_cands:
        fitting = [t for t in tn_cands if footprint(t, kb) <= budget]
        if not fitting:
            continue
        if B == 1:
            # prefer an even (>= 2) number of N tiles so the two parallel grid axes
            # shard evenly across v7x's two TensorCores.
            balanced = [t for t in fitting if (N // t) % 2 == 0]
            if balanced:
                return balanced[0], kb, footprint(balanced[0], kb)
        return fitting[0], kb, footprint(fitting[0], kb)

    tn, kb = tn_cands[-1], kb_cands[-1]                  # best effort, let compiler cope
    return tn, kb, footprint(tn, kb)


# --------------------------------------------------------------------------- wrapper


def graph_conv2d_edge(x, edge_index, weight, bias, *,
                      center_is_identity=True,
                      compute_dtype=jnp.bfloat16,
                      tile_n=None,
                      block_k=None):
    """GraphConv2d(conv='edge') forward.

    x:          (B, C, N, 1) float32 (NCHW, matching PyTorch)
    edge_index: (2, B, N, K) int32
    weight:     (Cout, 2C)   float32  (Conv2d 1x1 weight, kernel dims squeezed)
    bias:       (Cout,)      float32
    center_is_identity: True iff edge_index[1][b, n, :] == n (gcn_lib dense knn graph);
                        enables the hoisted-x_i fast path.
    compute_dtype: matmul-input dtype (default bfloat16; accumulation stays float32).
                   Pass jnp.float32 for bit-exact f32 math.
    returns:    (B, Cout, N, 1)
    """
    B, C, N, _ = x.shape
    K = edge_index.shape[-1]
    Cout = weight.shape[0]
    Cp = ((Cout + 127) // 128) * 128          # lane-dense (unmasked vst) output width
    out_dtype = x.dtype

    cdt = jnp.dtype(compute_dtype if compute_dtype is not None else x.dtype)
    x_nc = jnp.transpose(x[..., 0], (0, 2, 1)).astype(cdt)           # (B, N, C)

    # Split the 1x1-conv weight W = [W1 | W2] over the 2C input channels:
    #   cat([x_i, x_j - x_i]) @ W^T == x_i @ (W1 - W2)^T + x_j @ W2^T
    w1 = weight[:, :C]
    w2 = weight[:, C:]
    pad = Cp - Cout
    wd = jnp.pad(jnp.transpose(w1 - w2), ((0, 0), (0, pad))).astype(cdt)   # (C, Cp)
    w2t = jnp.pad(jnp.transpose(w2), ((0, 0), (0, pad))).astype(cdt)       # (C, Cp)
    b_p = jnp.pad(bias, (0, pad)).reshape(1, Cp).astype(jnp.float32)       # padded cols 0

    # Gather neighbor features into (B, K, N, C): K leading so each grid step's block is a
    # clean (Kb, tile_n, C) slab (sublane = nodes, lane = channels).
    # TODO(synk): move this gather in-kernel once a robust dynamic row-gather lowering exists.
    def gather_knc(idx):                                              # (B,N,K) -> (B,K,N,C)
        idx_kn = jnp.transpose(idx, (0, 2, 1)).reshape(B, K * N)
        g = jnp.take_along_axis(x_nc, idx_kn[:, :, None], axis=1)
        return g.reshape(B, K, N, C)

    x_j = gather_knc(edge_index[0])

    in_isz = cdt.itemsize
    out_isz = jnp.dtype(out_dtype).itemsize
    sub_mult = 8 if in_isz >= 4 else (16 if in_isz == 2 else 32)

    cap = _vmem_capacity_bytes()
    budget = min(cap * 3 // 4, 96 * 1024 * 1024)          # ~96 MiB on 128-MiB parts, ~48 on v7x
    tn, kb, fp = _select_tiling(N, K, B, C, Cp, in_isz, out_isz, budget, sub_mult,
                                center_is_identity, tile_n, block_k)
    vmem_limit = int(min(cap * 9 // 10, max(budget, fp * 5 // 4 + (4 << 20))))

    n_tiles = pl.cdiv(N, tn)
    k_steps = K // kb
    grid = (B, n_tiles, k_steps)

    flops = 2 * B * N * K * C * Cp + (2 * B * N * C * Cp if center_is_identity
                                      else 2 * B * N * K * C * Cp)
    bytes_accessed = (x_j.size * in_isz
                      + (x_nc.size if center_is_identity else x_j.size) * in_isz
                      + 2 * C * Cp * in_isz + Cp * 4
                      + B * N * Cp * out_isz)
    cost = pl.CostEstimate(flops=int(flops), transcendentals=0,
                           bytes_accessed=int(bytes_accessed))

    cparams = pltpu.CompilerParams(
        dimension_semantics=("parallel", "parallel", "arbitrary"),
        vmem_limit_bytes=vmem_limit)

    # Grid-invariant operands: single-buffered (constant index_map -> fetched once).
    w_specs = [
        pl.BlockSpec((C, Cp), lambda b, n, k: (0, 0), pipeline_mode=pl.Buffered(1)),
        pl.BlockSpec((C, Cp), lambda b, n, k: (0, 0), pipeline_mode=pl.Buffered(1)),
        pl.BlockSpec((1, Cp), lambda b, n, k: (0, 0), pipeline_mode=pl.Buffered(1)),
    ]
    gath_spec = pl.BlockSpec((1, kb, tn, C), lambda b, n, k: (b, k, n, 0))
    out_spec = pl.BlockSpec((1, tn, Cp), lambda b, n, k: (b, n, 0))

    if center_is_identity:
        out = pl.pallas_call(
            _edge_conv_center_kernel,
            out_shape=jax.ShapeDtypeStruct((B, N, Cp), out_dtype),
            grid_spec=pltpu.PrefetchScalarGridSpec(
                num_scalar_prefetch=0,
                grid=grid,
                in_specs=[pl.BlockSpec((1, tn, C), lambda b, n, k: (b, n, 0)),
                          gath_spec] + w_specs,
                out_specs=out_spec,
                scratch_shapes=[pltpu.VMEM((tn, Cp), jnp.float32),   # running max
                                pltpu.VMEM((tn, Cp), jnp.float32)],  # hoisted x_i term
            ),
            compiler_params=cparams,
            cost_estimate=cost,
        )(x_nc, x_j, wd, w2t, b_p)
    else:
        x_i = gather_knc(edge_index[1])
        out = pl.pallas_call(
            _edge_conv_general_kernel,
            out_shape=jax.ShapeDtypeStruct((B, N, Cp), out_dtype),
            grid_spec=pltpu.PrefetchScalarGridSpec(
                num_scalar_prefetch=0,
                grid=grid,
                in_specs=[gath_spec, gath_spec] + w_specs,
                out_specs=out_spec,
                scratch_shapes=[pltpu.VMEM((tn, Cp), jnp.float32)],  # running max
            ),
            compiler_params=cparams,
            cost_estimate=cost,
        )(x_i, x_j, wd, w2t, b_p)

    out = out[:, :, :Cout]                                            # drop lane padding
    return jnp.transpose(out, (0, 2, 1))[..., None].astype(out_dtype)  # (B, Cout, N, 1)


# --------------------------------------------------------------------------- demo / test


if __name__ == "__main__":
    B, C, N, K = 2, 16, 64, 16
    Cout = 32

    key = jax.random.PRNGKey(0)
    k_x, k_idx0, k_idx1, k_w, k_b = jax.random.split(key, 5)

    # input node features, NCHW [B, C, N, 1]
    x = jax.random.normal(k_x, (B, C, N, 1), dtype=jnp.float32)

    # edge_index[0]: neighbor indices (random); edge_index[1]: center indices (identity,
    # as produced by gcn_lib's dense knn graph)
    nbr_idx = jax.random.randint(k_idx0, (B, N, K), 0, N, dtype=jnp.int32)
    ctr_idx = jnp.broadcast_to(jnp.arange(N, dtype=jnp.int32)[None, :, None], (B, N, K))
    edge_index = jnp.stack([nbr_idx, ctr_idx], axis=0)                # (2, B, N, K)

    # deterministic 1x1 conv params: Conv2d(2C, Cout, 1, bias=True)
    weight = (jax.random.normal(k_w, (Cout, 2 * C), dtype=jnp.float32)
              * (1.0 / jnp.sqrt(2.0 * C)))
    bias = jax.random.normal(k_b, (Cout,), dtype=jnp.float32) * 0.1

    # pure-JAX reference of the original module
    x_nc_r = jnp.transpose(x[..., 0], (0, 2, 1))

    def _gather(idx):
        return jnp.take_along_axis(
            x_nc_r, idx.reshape(B, N * K)[:, :, None], axis=1).reshape(B, N, K, C)

    def reference(eidx):
        xi_r, xj_r = _gather(eidx[1]), _gather(eidx[0])
        feat_r = jnp.concatenate([xi_r, xj_r - xi_r], axis=-1)
        h_r = jnp.maximum(jnp.einsum("bnkc,oc->bnko", feat_r, weight) + bias, 0.0)
        return jnp.transpose(jnp.max(h_r, axis=2), (0, 2, 1))[..., None]

    # fast path (identity centers), exact f32 compute
    out_f32 = jax.block_until_ready(
        graph_conv2d_edge(x, edge_index, weight, bias, compute_dtype=jnp.float32))
    assert out_f32.shape == (B, Cout, N, 1), out_f32.shape
    assert jnp.allclose(out_f32, reference(edge_index), atol=1e-4, rtol=1e-4)

    # fast path, default bf16 compute (f32 accumulation) — looser tolerance
    out_bf16 = jax.block_until_ready(graph_conv2d_edge(x, edge_index, weight, bias))
    assert out_bf16.shape == (B, Cout, N, 1), out_bf16.shape
    assert jnp.allclose(out_bf16, reference(edge_index), atol=5e-2, rtol=5e-2)

    # general path (arbitrary center indices), exact f32 compute
    ctr_rand = jax.random.randint(k_idx1, (B, N, K), 0, N, dtype=jnp.int32)
    edge_index2 = jnp.stack([nbr_idx, ctr_rand], axis=0)
    out2 = jax.block_until_ready(
        graph_conv2d_edge(x, edge_index2, weight, bias, center_is_identity=False,
                          compute_dtype=jnp.float32))
    assert out2.shape == (B, Cout, N, 1), out2.shape
    assert jnp.allclose(out2, reference(edge_index2), atol=1e-4, rtol=1e-4)

    print("KERNEL_OK")
</pallas_src>

<mosaic_0001>
module attributes {stable_mosaic.version = 11 : i64} {
  func.func @_edge_conv_center_kernel(%arg0: i32, %arg1: i32, %arg2: i32, %arg3: memref<1x64x16xf32, #tpu.memory_space<vmem>>, %arg4: memref<1x8x64x16xf32, #tpu.memory_space<vmem>>, %arg5: memref<16x128xf32, #tpu.memory_space<vmem>>, %arg6: memref<16x128xf32, #tpu.memory_space<vmem>>, %arg7: memref<1x128xf32, #tpu.memory_space<vmem>>, %arg8: memref<1x64x128xf32, #tpu.memory_space<vmem>>, %arg9: memref<64x128xf32, #tpu.memory_space<vmem>>, %arg10: memref<64x128xf32, #tpu.memory_space<vmem>>) attributes {dimension_semantics = [#tpu.dimension_semantics<parallel>, #tpu.dimension_semantics<parallel>, #tpu.dimension_semantics<arbitrary>], iteration_bounds = array<i64: 2, 1, 2>, scalar_prefetch = 0 : i64, scratch_operands = 2 : i64, tpu.core_type = #tpu.core_type<tc>, window_params = [{transform_indices = @transform_0, window_bounds = array<i64: 1, 64, 16>}, {transform_indices = @transform_1, window_bounds = array<i64: 1, 8, 64, 16>}, {pipeline_mode = #tpu.pipeline_mode<synchronous>, transform_indices = @transform_2, window_bounds = array<i64: 16, 128>}, {pipeline_mode = #tpu.pipeline_mode<synchronous>, transform_indices = @transform_3, window_bounds = array<i64: 16, 128>}, {pipeline_mode = #tpu.pipeline_mode<synchronous>, transform_indices = @transform_4, window_bounds = array<i64: 1, 128>}, {transform_indices = @transform_5, window_bounds = array<i64: 1, 64, 128>}]} {
    %c0_i32 = arith.constant 0 : i32
    %0 = arith.cmpi eq, %arg2, %c0_i32 : i32
    %1 = arith.extui %0 : i1 to i32
    %c0_i32_0 = arith.constant 0 : i32
    %2 = arith.cmpi ne, %1, %c0_i32_0 : i32
    scf.if %2 {
      %c0_11 = arith.constant 0 : index
      %c0_12 = arith.constant 0 : index
      %c0_13 = arith.constant 0 : index
      %41 = vector.load %arg3[%c0_11, %c0_12, %c0_13] : memref<1x64x16xf32, #tpu.memory_space<vmem>>, vector<1x64x16xf32>
      %42 = vector.shape_cast %41 : vector<1x64x16xf32> to vector<64x16xf32>
      %c0_14 = arith.constant 0 : index
      %c0_15 = arith.constant 0 : index
      %43 = vector.load %arg5[%c0_14, %c0_15] : memref<16x128xf32, #tpu.memory_space<vmem>>, vector<16x128xf32>
      %cst_16 = arith.constant dense<0.000000e+00> : vector<64x128xf32>
      %44 = tpu.matmul %42, %43, %cst_16 {dimension_numbers = #tpu.dot_dimension_numbers<[1], [0], [0], [1], [0, 0, 1, 1], [], []>} : vector<64x16xf32>, vector<16x128xf32>, vector<64x128xf32> -> vector<64x128xf32>
      %c0_17 = arith.constant 0 : index
      %c0_18 = arith.constant 0 : index
      %45 = vector.load %arg7[%c0_17, %c0_18] : memref<1x128xf32, #tpu.memory_space<vmem>>, vector<1x128xf32>
      %46 = vector.broadcast %45 : vector<1x128xf32> to vector<64x128xf32>
      %47 = arith.addf %44, %46 : vector<64x128xf32>
      %c0_19 = arith.constant 0 : index
      %c0_20 = arith.constant 0 : index
      %48 = vector.load %arg10[%c0_19, %c0_20] : memref<64x128xf32, #tpu.memory_space<vmem>>, vector<64x128xf32>
      tpu.vector_store %arg10[%c0_19, %c0_20], %47 {strides = array<i32>} : memref<64x128xf32, #tpu.memory_space<vmem>>, vector<64x128xf32>,
    } else {
    }
    %c0 = arith.constant 0 : index
    %c0_1 = arith.constant 0 : index
    %c0_2 = arith.constant 0 : index
    %c0_3 = arith.constant 0 : index
    %3 = vector.load %arg4[%c0, %c0_1, %c0_2, %c0_3] : memref<1x8x64x16xf32, #tpu.memory_space<vmem>>, vector<1x8x64x16xf32>
    %4 = vector.shape_cast %3 : vector<1x8x64x16xf32> to vector<8x64x16xf32>
    %5 = vector.shape_cast %4 : vector<8x64x16xf32> to vector<512x16xf32>
    %c0_4 = arith.constant 0 : index
    %c0_5 = arith.constant 0 : index
    %6 = vector.load %arg6[%c0_4, %c0_5] : memref<16x128xf32, #tpu.memory_space<vmem>>, vector<16x128xf32>
    %cst = arith.constant dense<0.000000e+00> : vector<512x128xf32>
    %7 = tpu.matmul %5, %6, %cst {dimension_numbers = #tpu.dot_dimension_numbers<[1], [0], [0], [1], [0, 0, 1, 1], [], []>} : vector<512x16xf32>, vector<16x128xf32>, vector<512x128xf32> -> vector<512x128xf32>
    %8 = vector.shape_cast %7 : vector<512x128xf32> to vector<8x64x128xf32>
    %9 = vector.extract_strided_slice %8 {offsets = [0, 0, 0], sizes = [1, 64, 128], strides = [1, 1, 1]} : vector<8x64x128xf32> to vector<1x64x128xf32>
    %10 = vector.shape_cast %9 : vector<1x64x128xf32> to vector<64x128xf32>
    %11 = vector.extract_strided_slice %8 {offsets = [1, 0, 0], sizes = [1, 64, 128], strides = [1, 1, 1]} : vector<8x64x128xf32> to vector<1x64x128xf32>
    %12 = vector.shape_cast %11 : vector<1x64x128xf32> to vector<64x128xf32>
    %13 = arith.maximumf %10, %12 : vector<64x128xf32>
    %14 = vector.extract_strided_slice %8 {offsets = [2, 0, 0], sizes = [1, 64, 128], strides = [1, 1, 1]} : vector<8x64x128xf32> to vector<1x64x128xf32>
    %15 = vector.shape_cast %14 : vector<1x64x128xf32> to vector<64x128xf32>
    %16 = arith.maximumf %13, %15 : vector<64x128xf32>
    %17 = vector.extract_strided_slice %8 {offsets = [3, 0, 0], sizes = [1, 64, 128], strides = [1, 1, 1]} : vector<8x64x128xf32> to vector<1x64x128xf32>
    %18 = vector.shape_cast %17 : vector<1x64x128xf32> to vector<64x128xf32>
    %19 = arith.maximumf %16, %18 : vector<64x128xf32>
    %20 = vector.extract_strided_slice %8 {offsets = [4, 0, 0], sizes = [1, 64, 128], strides = [1, 1, 1]} : vector<8x64x128xf32> to vector<1x64x128xf32>
    %21 = vector.shape_cast %20 : vector<1x64x128xf32> to vector<64x128xf32>
    %22 = arith.maximumf %19, %21 : vector<64x128xf32>
    %23 = vector.extract_strided_slice %8 {offsets = [5, 0, 0], sizes = [1, 64, 128], strides = [1, 1, 1]} : vector<8x64x128xf32> to vector<1x64x128xf32>
    %24 = vector.shape_cast %23 : vector<1x64x128xf32> to vector<64x128xf32>
    %25 = arith.maximumf %22, %24 : vector<64x128xf32>
    %26 = vector.extract_strided_slice %8 {offsets = [6, 0, 0], sizes = [1, 64, 128], strides = [1, 1, 1]} : vector<8x64x128xf32> to vector<1x64x128xf32>
    %27 = vector.shape_cast %26 : vector<1x64x128xf32> to vector<64x128xf32>
    %28 = arith.maximumf %25, %27 : vector<64x128xf32>
    %29 = vector.extract_strided_slice %8 {offsets = [7, 0, 0], sizes = [1, 64, 128], strides = [1, 1, 1]} : vector<8x64x128xf32> to vector<1x64x128xf32>
    %30 = vector.shape_cast %29 : vector<1x64x128xf32> to vector<64x128xf32>
    %31 = arith.maximumf %28, %30 : vector<64x128xf32>
    %c0_i32_6 = arith.constant 0 : i32
    %32 = arith.cmpi eq, %arg2, %c0_i32_6 : i32
    %33 = arith.extui %32 : i1 to i32
    %c0_i32_7 = arith.constant 0 : i32
    %34 = arith.cmpi ne, %33, %c0_i32_7 : i32
    scf.if %34 {
      %c0_11 = arith.constant 0 : index
      %c0_12 = arith.constant 0 : index
      %41 = vector.load %arg9[%c0_11, %c0_12] : memref<64x128xf32, #tpu.memory_space<vmem>>, vector<64x128xf32>
      tpu.vector_store %arg9[%c0_11, %c0_12], %31 {strides = array<i32>} : memref<64x128xf32, #tpu.memory_space<vmem>>, vector<64x128xf32>,
    } else {
    }
    %c0_i32_8 = arith.constant 0 : i32
    %35 = arith.cmpi sgt, %arg2, %c0_i32_8 : i32
    %36 = arith.extui %35 : i1 to i32
    %c0_i32_9 = arith.constant 0 : i32
    %37 = arith.cmpi ne, %36, %c0_i32_9 : i32
    scf.if %37 {
      %c0_11 = arith.constant 0 : index
      %c0_12 = arith.constant 0 : index
      %41 = vector.load %arg9[%c0_11, %c0_12] : memref<64x128xf32, #tpu.memory_space<vmem>>, vector<64x128xf32>
      %42 = arith.maximumf %41, %31 : vector<64x128xf32>
      %c0_13 = arith.constant 0 : index
      %c0_14 = arith.constant 0 : index
      %43 = vector.load %arg9[%c0_13, %c0_14] : memref<64x128xf32, #tpu.memory_space<vmem>>, vector<64x128xf32>
      tpu.vector_store %arg9[%c0_13, %c0_14], %42 {strides = array<i32>} : memref<64x128xf32, #tpu.memory_space<vmem>>, vector<64x128xf32>,
    } else {
    }
    %c1_i32 = arith.constant 1 : i32
    %38 = arith.cmpi eq, %arg2, %c1_i32 : i32
    %39 = arith.extui %38 : i1 to i32
    %c0_i32_10 = arith.constant 0 : i32
    %40 = arith.cmpi ne, %39, %c0_i32_10 : i32
    scf.if %40 {
      %c0_11 = arith.constant 0 : index
      %c0_12 = arith.constant 0 : index
      %41 = vector.load %arg9[%c0_11, %c0_12] : memref<64x128xf32, #tpu.memory_space<vmem>>, vector<64x128xf32>
      %c0_13 = arith.constant 0 : index
      %c0_14 = arith.constant 0 : index
      %42 = vector.load %arg10[%c0_13, %c0_14] : memref<64x128xf32, #tpu.memory_space<vmem>>, vector<64x128xf32>
      %43 = arith.addf %41, %42 : vector<64x128xf32>
      %cst_15 = arith.constant 0.000000e+00 : f32
      %44 = vector.broadcast %cst_15 : f32 to vector<64x128xf32>
      %45 = arith.maximumf %43, %44 : vector<64x128xf32>
      %c0_16 = arith.constant 0 : index
      %c0_17 = arith.constant 0 : index
      %c0_18 = arith.constant 0 : index
      %46 = vector.load %arg8[%c0_16, %c0_17, %c0_18] : memref<1x64x128xf32, #tpu.memory_space<vmem>>, vector<1x64x128xf32>
      %47 = vector.shape_cast %46 : vector<1x64x128xf32> to vector<64x128xf32>
      %48 = vector.shape_cast %45 : vector<64x128xf32> to vector<1x64x128xf32>
      tpu.vector_store %arg8[%c0_16, %c0_17, %c0_18], %48 {strides = array<i32>} : memref<1x64x128xf32, #tpu.memory_space<vmem>>, vector<1x64x128xf32>,
    } else {
    }
    return
  }
  func.func @transform_0(%arg0: i32, %arg1: i32, %arg2: i32) -> (i32, i32, i32) {
    %c0_i32 = arith.constant 0 : i32
    %c0_i32_0 = arith.constant 0 : i32
    return %arg0, %arg1, %c0_i32 : i32, i32, i32
  }
  func.func @transform_1(%arg0: i32, %arg1: i32, %arg2: i32) -> (i32, i32, i32, i32) {
    %c0_i32 = arith.constant 0 : i32
    %c0_i32_0 = arith.constant 0 : i32
    return %arg0, %arg2, %arg1, %c0_i32 : i32, i32, i32, i32
  }
  func.func @transform_2(%arg0: i32, %arg1: i32, %arg2: i32) -> (i32, i32) {
    %c0_i32 = arith.constant 0 : i32
    %c0_i32_0 = arith.constant 0 : i32
    %c0_i32_1 = arith.constant 0 : i32
    return %c0_i32, %c0_i32_0 : i32, i32
  }
  func.func @transform_3(%arg0: i32, %arg1: i32, %arg2: i32) -> (i32, i32) {
    %c0_i32 = arith.constant 0 : i32
    %c0_i32_0 = arith.constant 0 : i32
    %c0_i32_1 = arith.constant 0 : i32
    return %c0_i32, %c0_i32_0 : i32, i32
  }
  func.func @transform_4(%arg0: i32, %arg1: i32, %arg2: i32) -> (i32, i32) {
    %c0_i32 = arith.constant 0 : i32
    %c0_i32_0 = arith.constant 0 : i32
    %c0_i32_1 = arith.constant 0 : i32
    return %c0_i32, %c0_i32_0 : i32, i32
  }
  func.func @transform_5(%arg0: i32, %arg1: i32, %arg2: i32) -> (i32, i32, i32) {
    %c0_i32 = arith.constant 0 : i32
    %c0_i32_0 = arith.constant 0 : i32
    return %arg0, %arg1, %c0_i32 : i32, i32, i32
  }
}

</mosaic_0001>

<llo_original>
// kernel: tpu_custom_call.1
$region0: #{tpu_custom_call.1}
  #allocation0 [shape = 'u32[]', space=smem, size = 0x4, offset = 0x4, fixed_abs, tag = 'smem constant byte address 0x4 - core index']
  #allocation1 [shape = 'u32[144,128]{1,0:T(1,128)}', space=vmem, size = 0x12000, scoped, tag = 'internal scratch']
  #allocation2 [shape = 'f32[64,128]{1,0:T(8,128)}', space=vmem, size = 0x8000, scoped, tag = 'scratch operand']
  #allocation3 [shape = 'f32[64,128]{1,0:T(8,128)}', space=vmem, size = 0x8000, scoped, tag = 'scratch operand']
  %s0 = inlined_call_operand.vmem [shape: f32[2,64,16], index: 0, kind: input, shape index: {}]
  %s1 = inlined_call_operand.vmem [shape: f32[2,16,64,16], index: 1, kind: input, shape index: {}]
  %s2 = inlined_call_operand.vmem [shape: f32[16,128], index: 2, kind: input, shape index: {}]
  %s3 = inlined_call_operand.vmem [shape: f32[16,128], index: 3, kind: input, shape index: {}]
  %s4 = inlined_call_operand.vmem [shape: f32[1,128], index: 4, kind: input, shape index: {}]
  %s5 = inlined_call_operand.hbm [shape: f32[2,64,128], index: 5, kind: output, shape index: {}]
  %s6 = sld [smem:[#allocation0]]
  $region69: #{tpu_custom_call.1} parent=0
    _
  %s8 = ssub.s32 1, %s6
  %s9 = scalar_select 0, %s8, %s6
  $region1: #{tpu_custom_call.1} parent=0
    #allocation4 [shape = 'u8[65536]{0}', space=vmem, size = 0x10000, scoped, tag = 'output window, operand 0']
    #allocation5 [shape = 's32[2]{0}', space=sflag, size = 0x8, scoped, tag = 'scoped memory for tpu_custom_call.1']
    %10 = vsyncpa [#allocation5], 0
    %s11 = scalar_lea.sflag [#allocation5], 1
    %12 = vsyncpa %s11, 0
    loop: start=0, step=1, limit=6
    $region2: #{tpu_custom_call.1} parent=1 // loop_pre_header
      _
    $region3: #{tpu_custom_call.1} parent=1 // loop_header
      %s14 = sphi 0, %s18
      %p15 = scmp.ge.s32.totalorder %s14, 6
      %s21 = sphi 0, %s40
      %s22 = sphi 0, %s36
      %s23 = sphi 0, %s32
      %s24 = sphi 0, %s21
      %s25 = sphi 0, %s22
      %s26 = sphi 0, %s23
      %s27 = sphi 0, %s24
      %s28 = sphi 0, %s25
      %s29 = sphi 0, %s26
      %s45 = sphi 0, %s47
      %s48 = sphi 0, %s45
      %s49 = sphi 0, %s48
      %s65 = sphi 0, %s49
      %s75 = sphi 0, %s77
      %s78 = sphi 0, %s75
      %s79 = sphi 0, %s78
      %s95 = sphi 0, %s79
      %s99 = sphi 0, %s99
      %s101 = sphi 0, %s99
      %s102 = sphi 0, %s101
      %s116 = sphi 0, %s102
      %s120 = sphi 0, %s120
      %s122 = sphi 0, %s120
      %s123 = sphi 0, %s122
      %s137 = sphi 0, %s123
      %s141 = sphi 0, %s141
      %s143 = sphi 0, %s141
      %s144 = sphi 0, %s143
      %s158 = sphi 0, %s144
      %s166 = sphi 0, %s168
      %s169 = sphi 0, %s166
      %s170 = sphi 0, %s169
      %s186 = sphi 0, %s170
    $region4: #{tpu_custom_call.1} parent=1 // loop_header_branch
      %17 = sbr.rel (%p15) target = $region8
    $region5: #{tpu_custom_call.1} parent=1 // loop_body
      %s19 = ssub.s32 %s14, 1
      %s20 = ssub.s32 %s14, 2
      %s30 = sadd.s32 1, %s23
      %p31 = scmp.ge.s32.totalorder %s30, 2
      %s32 = scalar_select %p31, 0, %s30
      %s33 = sadd.s32 1, %s22
      %s34 = scalar_select %p31, %s33, %s22
      %p35 = scmp.ge.s32.totalorder %s34, 1
      %s36 = scalar_select %p35, 0, %s34
      %s37 = sadd.s32 1, %s21
      %s38 = scalar_select %p35, %s37, %s21
      %p39 = scmp.ge.s32.totalorder %s38, 2
      %s40 = scalar_select %p39, 0, %s38
      %s41 = ssub.s32 %s21, %s40
      %s42 = ssub.s32 %s22, %s36
      %s43 = sor.u32 %s41, %s42
      %p44 = scmp.eq.s32.totalorder %s43, 0
      %s46 = sadd.s32 %s45, 1
      %s47 = scalar_select %p44, %s45, %s46
      %p50 = pneg %p44
      %p51 = scmp.eq.s32.totalorder %s14, 3
      %p52 = por %p50, %p51
      %p53 = scmp.ne.s32.totalorder %s45, %s48
      %p54 = scmp.eq.s32.totalorder %s14, 0
      %p55 = por %p53, %p54
      %p56 = scmp.ne.s32.totalorder %s45, %s48
      %p57 = scmp.eq.s32.totalorder %s19, 3
      %p58 = por %p56, %p57
      %p59 = scmp.ne.s32.totalorder %s48, %s49
      %p60 = scmp.eq.s32.totalorder %s19, 0
      %p61 = por %p59, %p60
      %p62 = scmp.ne.s32.totalorder %s48, %s49
      %p63 = scmp.eq.s32.totalorder %s20, 3
      %p64 = por %p62, %p63
      %p66 = scmp.ne.s32.totalorder %s49, %s65
      %p67 = scmp.eq.s32.totalorder %s20, 0
      %p68 = por %p66, %p67
      %s69 = ssub.s32 %s21, %s40
      %s70 = ssub.s32 %s23, %s32
      %s71 = sor.u32 %s69, %s70
      %s72 = ssub.s32 %s22, %s36
      %s73 = sor.u32 %s71, %s72
      %p74 = scmp.eq.s32.totalorder %s73, 0
      %s76 = sadd.s32 %s75, 1
      %s77 = scalar_select %p74, %s75, %s76
      %p80 = pneg %p74
      %p81 = scmp.eq.s32.totalorder %s14, 3
      %p82 = por %p80, %p81
      %p83 = scmp.ne.s32.totalorder %s75, %s78
      %p84 = scmp.eq.s32.totalorder %s14, 0
      %p85 = por %p83, %p84
      %p86 = scmp.ne.s32.totalorder %s75, %s78
      %p87 = scmp.eq.s32.totalorder %s19, 3
      %p88 = por %p86, %p87
      %p89 = scmp.ne.s32.totalorder %s78, %s79
      %p90 = scmp.eq.s32.totalorder %s19, 0
      %p91 = por %p89, %p90
      %p92 = scmp.ne.s32.totalorder %s78, %s79
      %p93 = scmp.eq.s32.totalorder %s20, 3
      %p94 = por %p92, %p93
      %p96 = scmp.ne.s32.totalorder %s79, %s95
      %p97 = scmp.eq.s32.totalorder %s20, 0
      %p98 = por %p96, %p97
      %s100 = sadd.s32 %s99, 1
      %p103 = scmp.eq.s32.totalorder %s14, 3
      %p104 = scmp.ne.s32.totalorder %s99, %s101
      %p105 = scmp.eq.s32.totalorder %s14, 0
      %p106 = por %p104, %p105
      %p107 = scmp.ne.s32.totalorder %s99, %s101
      %p108 = scmp.eq.s32.totalorder %s19, 3
      %p109 = por %p107, %p108
      %p110 = scmp.ne.s32.totalorder %s101, %s102
      %p111 = scmp.eq.s32.totalorder %s19, 0
      %p112 = por %p110, %p111
      %p113 = scmp.ne.s32.totalorder %s101, %s102
      %p114 = scmp.eq.s32.totalorder %s20, 3
      %p115 = por %p113, %p114
      %p117 = scmp.ne.s32.totalorder %s102, %s116
      %p118 = scmp.eq.s32.totalorder %s20, 0
      %p119 = por %p117, %p118
      %s121 = sadd.s32 %s120, 1
      %p124 = scmp.eq.s32.totalorder %s14, 3
      %p125 = scmp.ne.s32.totalorder %s120, %s122
      %p126 = scmp.eq.s32.totalorder %s14, 0
      %p127 = por %p125, %p126
      %p128 = scmp.ne.s32.totalorder %s120, %s122
      %p129 = scmp.eq.s32.totalorder %s19, 3
      %p130 = por %p128, %p129
      %p131 = scmp.ne.s32.totalorder %s122, %s123
      %p132 = scmp.eq.s32.totalorder %s19, 0
      %p133 = por %p131, %p132
      %p134 = scmp.ne.s32.totalorder %s122, %s123
      %p135 = scmp.eq.s32.totalorder %s20, 3
      %p136 = por %p134, %p135
      %p138 = scmp.ne.s32.totalorder %s123, %s137
      %p139 = scmp.eq.s32.totalorder %s20, 0
      %p140 = por %p138, %p139
      %s142 = sadd.s32 %s141, 1
      %p145 = scmp.eq.s32.totalorder %s14, 3
      %p146 = scmp.ne.s32.totalorder %s141, %s143
      %p147 = scmp.eq.s32.totalorder %s14, 0
      %p148 = por %p146, %p147
      %p149 = scmp.ne.s32.totalorder %s141, %s143
      %p150 = scmp.eq.s32.totalorder %s19, 3
      %p151 = por %p149, %p150
      %p152 = scmp.ne.s32.totalorder %s143, %s144
      %p153 = scmp.eq.s32.totalorder %s19, 0
      %p154 = por %p152, %p153
      %p155 = scmp.ne.s32.totalorder %s143, %s144
      %p156 = scmp.eq.s32.totalorder %s20, 3
      %p157 = por %p155, %p156
      %p159 = scmp.ne.s32.totalorder %s144, %s158
      %p160 = scmp.eq.s32.totalorder %s20, 0
      %p161 = por %p159, %p160
      %s162 = ssub.s32 %s21, %s40
      %s163 = ssub.s32 %s22, %s36
      %s164 = sor.u32 %s162, %s163
      %p165 = scmp.eq.s32.totalorder %s164, 0
      %s167 = sadd.s32 %s166, 1
      %s168 = scalar_select %p165, %s166, %s167
      %p171 = pneg %p165
      %p172 = scmp.eq.s32.totalorder %s14, 3
      %p173 = por %p171, %p172
      %p174 = scmp.ne.s32.totalorder %s166, %s169
      %p175 = scmp.eq.s32.totalorder %s14, 0
      %p176 = por %p174, %p175
      %p177 = scmp.ne.s32.totalorder %s166, %s169
      %p178 = scmp.eq.s32.totalorder %s19, 3
      %p179 = por %p177, %p178
      %p180 = scmp.ne.s32.totalorder %s169, %s170
      %p181 = scmp.eq.s32.totalorder %s19, 0
      %p182 = por %p180, %p181
      %p183 = scmp.ne.s32.totalorder %s169, %s170
      %p184 = scmp.eq.s32.totalorder %s20, 3
      %p185 = por %p183, %p184
      %p187 = scmp.ne.s32.totalorder %s170, %s186
      %p188 = scmp.eq.s32.totalorder %s20, 0
      %p189 = por %p187, %p188
      %p190 = scmp.le.s32.totalorder 1, %s14
      %p191 = scmp.lt.s32.totalorder %s14, 5
      %p192 = pnand %p190, %p191
      %p193 = pneg %p192
      // Predicated region
      $region9: #{tpu_custom_call.1} parent=5 // pred_check
        _
      $region10: #{tpu_custom_call.1} parent=5 // pred_check_branch
        %195 = sbr.rel (%p192) target = $region12
      $region11: #{tpu_custom_call.1} parent=5 // pred_region
        %s196 = ssub.s32 %s14, 1
        // Predicated region
        $region13: #{tpu_custom_call.1} parent=11 // pred_check
          %p197 = pneg %p112
        $region14: #{tpu_custom_call.1} parent=11 // pred_check_branch
          %199 = sbr.rel (%p197) target = $region16
        $region15: #{tpu_custom_call.1} parent=11 // pred_region
          _
        $region16: #{tpu_custom_call.1} parent=11 // pred_fallthru
          _
        // Predicated region
        $region17: #{tpu_custom_call.1} parent=11 // pred_check
          %p200 = pneg %p133
        $region18: #{tpu_custom_call.1} parent=11 // pred_check_branch
          %202 = sbr.rel (%p200) target = $region20
        $region19: #{tpu_custom_call.1} parent=11 // pred_region
          _
        $region20: #{tpu_custom_call.1} parent=11 // pred_fallthru
          _
        // Predicated region
        $region21: #{tpu_custom_call.1} parent=11 // pred_check
          %p203 = pneg %p154
        $region22: #{tpu_custom_call.1} parent=11 // pred_check_branch
          %205 = sbr.rel (%p203) target = $region24
        $region23: #{tpu_custom_call.1} parent=11 // pred_region
          _
        $region24: #{tpu_custom_call.1} parent=11 // pred_fallthru
          _
      $region12: #{tpu_custom_call.1} parent=5 // pred_fallthru
        _
      %p206 = scmp.lt.s32.totalorder %s14, 4
      // Predicated region
      $region25: #{tpu_custom_call.1} parent=5 // pred_check
        %p207 = pneg %p206
      $region26: #{tpu_custom_call.1} parent=5 // pred_check_branch
        %209 = sbr.rel (%p207) target = $region28
      $region27: #{tpu_custom_call.1} parent=5 // pred_region
        // Predicated region
        $region29: #{tpu_custom_call.1} parent=27 // pred_check
          %p210 = pneg %p55
        $region30: #{tpu_custom_call.1} parent=27 // pred_check_branch
          %212 = sbr.rel (%p210) target = $region32
        $region31: #{tpu_custom_call.1} parent=27 // pred_region
          %s213 = smul.u32 8, %s22
          %p214 = scmp.lt.s32.totalorder %s21, 1
          %s215 = scalar_select %p214, %s21, 1
          %p216 = scmp.lt.s32.totalorder %s213, 7
          %s217 = scalar_select %p216, %s213, 7
          %s218 = smul.addr %s215, 8
          %s219 = sadd.s32 %s217, %s218
          %s220 = smul.addr %s219, 8
          %s221 = scalar_lea.vmem %s0, %s220
          %s222 = smul.u32 8, %s22
        $region32: #{tpu_custom_call.1} parent=27 // pred_fallthru
          _
        // Predicated region
        $region33: #{tpu_custom_call.1} parent=27 // pred_check
          %p223 = pneg %p85
        $region34: #{tpu_custom_call.1} parent=27 // pred_check_branch
          %225 = sbr.rel (%p223) target = $region36
        $region35: #{tpu_custom_call.1} parent=27 // pred_region
          %s226 = smul.u32 8, %s23
          %s227 = smul.u32 8, %s22
          %p228 = scmp.lt.s32.totalorder %s21, 1
          %s229 = scalar_select %p228, %s21, 1
          %p230 = scmp.lt.s32.totalorder %s226, 15
          %s231 = scalar_select %p230, %s226, 15
          %p232 = scmp.lt.s32.totalorder %s227, 7
          %s233 = scalar_select %p232, %s227, 7
          %s234 = smul.addr %s231, 8
          %s235 = sadd.s32 %s233, %s234
          %s236 = smul.addr %s229, 128
          %s237 = sadd.s32 %s235, %s236
          %s238 = smul.addr %s237, 8
          %s239 = scalar_lea.vmem %s1, %s238
          %s240 = smul.u32 8, %s23
          %s241 = smul.u32 8, %s22
        $region36: #{tpu_custom_call.1} parent=27 // pred_fallthru
          _
      $region28: #{tpu_custom_call.1} parent=5 // pred_fallthru
        _
      %p242 = scmp.le.s32.totalorder 1, %s14
      %p243 = scmp.lt.s32.totalorder %s14, 5
      %p244 = pnand %p242, %p243
      %p245 = pneg %p244
      // Predicated region
      $region37: #{tpu_custom_call.1} parent=5 // pred_check
        _
      $region38: #{tpu_custom_call.1} parent=5 // pred_check_branch
        %247 = sbr.rel (%p244) target = $region40
      $region39: #{tpu_custom_call.1} parent=5 // pred_region
        %s248 = ssub.s32 %s14, 1
        %s249 = smul.u32 8, %s25
        %p250 = scmp.lt.s32.totalorder %s24, 1
        %s251 = scalar_select %p250, %s24, 1
        %p252 = scmp.lt.s32.totalorder %s249, 7
        %s253 = scalar_select %p252, %s249, 7
        %s254 = smul.addr %s251, 8
        %s255 = sadd.s32 %s253, %s254
        %s256 = smul.addr %s255, 8
        %s257 = scalar_lea.vmem %s0, %s256
        %p258 = pneg %p61
        %p259 = pneg %p58
        %s260 = smul.u32 8, %s26
        %s261 = smul.u32 8, %s25
        %p262 = scmp.lt.s32.totalorder %s24, 1
        %s263 = scalar_select %p262, %s24, 1
        %p264 = scmp.lt.s32.totalorder %s260, 15
        %s265 = scalar_select %p264, %s260, 15
        %p266 = scmp.lt.s32.totalorder %s261, 7
        %s267 = scalar_select %p266, %s261, 7
        %s268 = smul.addr %s265, 8
        %s269 = sadd.s32 %s267, %s268
        %s270 = smul.addr %s263, 128
        %s271 = sadd.s32 %s269, %s270
        %s272 = smul.addr %s271, 8
        %s273 = scalar_lea.vmem %s1, %s272
        %p274 = pneg %p91
        %p275 = pneg %p88
        %p276 = pneg %p112
        %p277 = pneg %p109
        %p278 = pneg %p133
        %p279 = pneg %p130
        %p280 = pneg %p154
        %p281 = pneg %p151
        %p282 = pneg %p182
        %p283 = pneg %p179
        %s284 = sand.u32 %s169, 1
        %s285 = scalar_lea.sflag [#allocation5], %s284
        %s286 = sand.u32 %s169, 1
        %s287 = smul.addr %s286, 64
        %s288 = scalar_lea.vmem [#allocation4], %s287
        %s289 = smul.u32 8, %s25
        %p290 = scmp.lt.s32.totalorder %s24, 1
        %s291 = scalar_select %p290, %s24, 1
        %p292 = scmp.lt.s32.totalorder %s289, 7
        %s293 = scalar_select %p292, %s289, 7
        %s294 = smul.addr %s291, 8
        %s295 = sadd.s32 %s293, %s294
        %s296 = smul.addr %s295, 8
        %s297 = scalar_lea.vmem %s0, %s296
        %s298 = smul.u32 8, %s25
        %s299 = smul.u32 8, %s26
        %s300 = smul.u32 8, %s25
        %p301 = scmp.lt.s32.totalorder %s24, 1
        %s302 = scalar_select %p301, %s24, 1
        %p303 = scmp.lt.s32.totalorder %s299, 15
        %s304 = scalar_select %p303, %s299, 15
        %p305 = scmp.lt.s32.totalorder %s300, 7
        %s306 = scalar_select %p305, %s300, 7
        %s307 = smul.addr %s304, 8
        %s308 = sadd.s32 %s306, %s307
        %s309 = smul.addr %s302, 128
        %s310 = sadd.s32 %s308, %s309
        %s311 = smul.addr %s310, 8
        %s312 = scalar_lea.vmem %s1, %s311
        %s313 = smul.u32 8, %s26
        %s314 = smul.u32 8, %s25
        %s315 = smul.u32 8, %s25
        %p316 = scmp.eq.s32.totalorder %s26, 0
        // Predicated region
        $region41: #{tpu_custom_call.1} parent=39 // pred_check
          %p317 = pneg %p316
        $region42: #{tpu_custom_call.1} parent=39 // pred_check_branch
          %319 = sbr.rel (%p317) target = $region44
        $region43: #{tpu_custom_call.1} parent=39 // pred_region
          %v320 = vld [vmem:[%s297] sm:$0xff]
          %v321 = vld [vmem:[%s297 + $0x8] sm:$0xff]
          %v322 = vld [vmem:[%s297 + $0x10] sm:$0xff]
          %v323 = vld [vmem:[%s297 + $0x18] sm:$0xff]
          %v324 = vld [vmem:[%s297 + $0x20] sm:$0xff]
          %v325 = vld [vmem:[%s297 + $0x28] sm:$0xff]
          %v326 = vld [vmem:[%s297 + $0x30] sm:$0xff]
          %v327 = vld [vmem:[%s297 + $0x38] sm:$0xff]
          %v328 = vld [vmem:[%s2] sm:$0xff]
          %v329 = vld [vmem:[%s2 + $0x8] sm:$0xff]
          %v330 = vld [vmem:[%s4] sm:$0x1]
          %v332 = vlaneseq
          %v333 = vshrl.u32 %v332, 7
          %v334 = vsub.s32 0, %v333
          %v335 = vrot.slane %v330, %v334
          %vm337 = vcmask 130048
          %v339 = vsel %vm337, %v320, 0
          %v342 = vsel %vm337, %v321, 0
          %v345 = vsel %vm337, %v322, 0
          %v348 = vsel %vm337, %v323, 0
          %v351 = vsel %vm337, %v324, 0
          %v354 = vsel %vm337, %v325, 0
          %v357 = vsel %vm337, %v326, 0
          %v360 = vsel %vm337, %v327, 0
          %362 = vmatprep.subr.mxu0 0.0
          %363 = vmatpush1.msra.mxu0 %v328
          %364 = vmatprep.subr.mxu0 0.0
          %365 = vmatpush1.msra.mxu0 %v329
          %366 = vmatprep.subr.mxu0 0.0
          %367 = vmatpush1.msra.mxu0 0.0
          %368 = vmatprep.subr.mxu0 0.0
          %369 = vmatpush1.msra.mxu0 0.0
          %370 = vmatprep.subr.mxu0 0.0
          %371 = vmatpush1.msra.mxu0 0.0
          %372 = vmatprep.subr.mxu0 0.0
          %373 = vmatpush1.msra.mxu0 0.0
          %374 = vmatprep.subr.mxu0 0.0
          %375 = vmatpush1.msra.mxu0 0.0
          %376 = vmatprep.subr.mxu0 0.0
          %377 = vmatpush1.msra.mxu0 0.0
          %378 = vmatprep.subr.mxu0 0.0
          %379 = vmatpush1.msra.mxu0 0.0
          %380 = vmatprep.subr.mxu0 0.0
          %381 = vmatpush1.msra.mxu0 0.0
          %382 = vmatprep.subr.mxu0 0.0
          %383 = vmatpush1.msra.mxu0 0.0
          %384 = vmatprep.subr.mxu0 0.0
          %385 = vmatpush1.msra.mxu0 0.0
          %386 = vmatprep.subr.mxu0 0.0
          %387 = vmatpush1.msra.mxu0 0.0
          %388 = vmatprep.subr.mxu0 0.0
          %389 = vmatpush1.msra.mxu0 0.0
          %390 = vmatprep.subr.mxu0 0.0
          %391 = vmatpush1.msra.mxu0 0.0
          %392 = vmatprep.subr.mxu0 0.0
          %393 = vmatpush1.msra.mxu0 0.0
          %394 = vmatprep.subr.mxu0 0.0
          %395 = vmatpush1.msra.mxu0 0.0
          %396 = vmatprep.subr.mxu0 0.0
          %397 = vmatpush1.msra.mxu0 0.0
          %398 = vmatprep.subr.mxu0 0.0
          %399 = vmatpush1.msra.mxu0 0.0
          %400 = vmatprep.subr.mxu0 0.0
          %401 = vmatpush1.msra.mxu0 0.0
          %402 = vmatprep.subr.mxu0 0.0
          %403 = vmatpush1.msra.mxu0 0.0
          %404 = vmatprep.subr.mxu0 0.0
          %405 = vmatpush1.msra.mxu0 0.0
          %406 = vmatprep.subr.mxu0 0.0
          %407 = vmatpush1.msra.mxu0 0.0
          %408 = vmatprep.subr.mxu0 0.0
          %409 = vmatpush1.msra.mxu0 0.0
          %410 = vmatprep.subr.mxu0 0.0
          %411 = vmatpush1.msra.mxu0 0.0
          %412 = vmatprep.subr.mxu0 0.0
          %413 = vmatpush1.msra.mxu0 0.0
          %414 = vmatprep.subr.mxu0 0.0
          %415 = vmatpush1.msra.mxu0 0.0
          %416 = vmatprep.subr.mxu0 0.0
          %417 = vmatpush1.msra.mxu0 0.0
          %418 = vmatprep.subr.mxu0 0.0
          %419 = vmatpush1.msra.mxu0 0.0
          %420 = vmatprep.subr.mxu0 0.0
          %421 = vmatpush1.msra.mxu0 0.0
          %422 = vmatprep.subr.mxu0 0.0
          %423 = vmatpush1.msra.mxu0 0.0
          %424 = vmatprep.subr.mxu0 0.0
          %425 = vmatpush1.msra.mxu0 0.0
          %426 = vmatprep.mubr.f32.mxu0 0.0
          %427 = vmatmul.mubr.f32.gmra.mrb[0].mxu0 %v339
          %v428 = vpop.f32.mrb[0].mxu0
          %v429 = vadd.f32 %v335, %v428
          %v430 = vpop.f32.mrb[0].mxu0
          %431 = vmatprep.mubr.f32.mxu0 0.0
          %432 = vmatmul.mubr.f32.gmra.mrb[0].mxu0 %v342
          %v433 = vpop.f32.mrb[0].mxu0
          %v434 = vadd.f32 %v335, %v433
          %v435 = vpop.f32.mrb[0].mxu0
          %436 = vmatprep.mubr.f32.mxu0 0.0
          %437 = vmatmul.mubr.f32.gmra.mrb[0].mxu0 %v345
          %v438 = vpop.f32.mrb[0].mxu0
          %v439 = vadd.f32 %v335, %v438
          %v440 = vpop.f32.mrb[0].mxu0
          %441 = vmatprep.mubr.f32.mxu0 0.0
          %442 = vmatmul.mubr.f32.gmra.mrb[0].mxu0 %v348
          %v443 = vpop.f32.mrb[0].mxu0
          %v444 = vadd.f32 %v335, %v443
          %v445 = vpop.f32.mrb[0].mxu0
          %446 = vmatprep.mubr.f32.mxu0 0.0
          %447 = vmatmul.mubr.f32.gmra.mrb[0].mxu0 %v351
          %v448 = vpop.f32.mrb[0].mxu0
          %v449 = vadd.f32 %v335, %v448
          %v450 = vpop.f32.mrb[0].mxu0
          %451 = vmatprep.mubr.f32.mxu0 0.0
          %452 = vmatmul.mubr.f32.gmra.mrb[0].mxu0 %v354
          %v453 = vpop.f32.mrb[0].mxu0
          %v454 = vadd.f32 %v335, %v453
          %v455 = vpop.f32.mrb[0].mxu0
          %456 = vmatprep.mubr.f32.mxu0 0.0
          %457 = vmatmul.mubr.f32.gmra.mrb[0].mxu0 %v357
          %v458 = vpop.f32.mrb[0].mxu0
          %v459 = vadd.f32 %v335, %v458
          %v460 = vpop.f32.mrb[0].mxu0
          %461 = vmatprep.mubr.f32.mxu0 0.0
          %462 = vmatmul.mubr.f32.gmra.mrb[0].mxu0 %v360
          %v463 = vpop.f32.mrb[0].mxu0
          %v464 = vadd.f32 %v335, %v463
          %v465 = vpop.f32.mrb[0].mxu0
          %466 = vdwg.mxu0
          %467 = vst [vmem:[#allocation3] sm:$0xff] %v429
          %468 = vst [vmem:[#allocation3 + $0x8] sm:$0xff] %v434
          %469 = vst [vmem:[#allocation3 + $0x10] sm:$0xff] %v439
          %470 = vst [vmem:[#allocation3 + $0x18] sm:$0xff] %v444
          %471 = vst [vmem:[#allocation3 + $0x20] sm:$0xff] %v449
          %472 = vst [vmem:[#allocation3 + $0x28] sm:$0xff] %v454
          %473 = vst [vmem:[#allocation3 + $0x30] sm:$0xff] %v459
          %474 = vst [vmem:[#allocation3 + $0x38] sm:$0xff] %v464
        $region44: #{tpu_custom_call.1} parent=39 // pred_fallthru
          _
        %v475 = vld [vmem:[%s312] sm:$0xff]
        %v476 = vld [vmem:[%s312 + $0x8] sm:$0xff]
        %v477 = vld [vmem:[%s312 + $0x10] sm:$0xff]
        %v478 = vld [vmem:[%s312 + $0x18] sm:$0xff]
        %v479 = vld [vmem:[%s312 + $0x20] sm:$0xff]
        %v480 = vld [vmem:[%s312 + $0x28] sm:$0xff]
        %v481 = vld [vmem:[%s312 + $0x30] sm:$0xff]
        %v482 = vld [vmem:[%s312 + $0x38] sm:$0xff]
        %v483 = vld [vmem:[%s312 + $0x40] sm:$0xff]
        %v484 = vld [vmem:[%s312 + $0x48] sm:$0xff]
        %v485 = vld [vmem:[%s312 + $0x50] sm:$0xff]
        %v486 = vld [vmem:[%s312 + $0x58] sm:$0xff]
        %v487 = vld [vmem:[%s312 + $0x60] sm:$0xff]
        %v488 = vld [vmem:[%s312 + $0x68] sm:$0xff]
        %v489 = vld [vmem:[%s312 + $0x70] sm:$0xff]
        %v490 = vld [vmem:[%s312 + $0x78] sm:$0xff]
        %v491 = vld [vmem:[%s312 + $0x80] sm:$0xff]
        %v492 = vld [vmem:[%s312 + $0x88] sm:$0xff]
        %v493 = vld [vmem:[%s312 + $0x90] sm:$0xff]
        %v494 = vld [vmem:[%s312 + $0x98] sm:$0xff]
        %v495 = vld [vmem:[%s312 + $0xa0] sm:$0xff]
        %v496 = vld [vmem:[%s312 + $0xa8] sm:$0xff]
        %v497 = vld [vmem:[%s312 + $0xb0] sm:$0xff]
        %v498 = vld [vmem:[%s312 + $0xb8] sm:$0xff]
        %v499 = vld [vmem:[%s312 + $0xc0] sm:$0xff]
        %v500 = vld [vmem:[%s312 + $0xc8] sm:$0xff]
        %v501 = vld [vmem:[%s312 + $0xd0] sm:$0xff]
        %v502 = vld [vmem:[%s312 + $0xd8] sm:$0xff]
        %v503 = vld [vmem:[%s312 + $0xe0] sm:$0xff]
        %v504 = vld [vmem:[%s312 + $0xe8] sm:$0xff]
        %v505 = vld [vmem:[%s312 + $0xf0] sm:$0xff]
        %v506 = vld [vmem:[%s312 + $0xf8] sm:$0xff]
        %v507 = vld [vmem:[%s312 + $0x100] sm:$0xff]
        %v508 = vld [vmem:[%s312 + $0x108] sm:$0xff]
        %v509 = vld [vmem:[%s312 + $0x110] sm:$0xff]
        %v510 = vld [vmem:[%s312 + $0x118] sm:$0xff]
        %v511 = vld [vmem:[%s312 + $0x120] sm:$0xff]
        %v512 = vld [vmem:[%s312 + $0x128] sm:$0xff]
        %v513 = vld [vmem:[%s312 + $0x130] sm:$0xff]
        %v514 = vld [vmem:[%s312 + $0x138] sm:$0xff]
        %v515 = vld [vmem:[%s312 + $0x140] sm:$0xff]
        %v516 = vld [vmem:[%s312 + $0x148] sm:$0xff]
        %v517 = vld [vmem:[%s312 + $0x150] sm:$0xff]
        %v518 = vld [vmem:[%s312 + $0x158] sm:$0xff]
        %v519 = vld [vmem:[%s312 + $0x160] sm:$0xff]
        %v520 = vld [vmem:[%s312 + $0x168] sm:$0xff]
        %v521 = vld [vmem:[%s312 + $0x170] sm:$0xff]
        %v522 = vld [vmem:[%s312 + $0x178] sm:$0xff]
        %v523 = vld [vmem:[%s312 + $0x180] sm:$0xff]
        %v524 = vld [vmem:[%s312 + $0x188] sm:$0xff]
        %v525 = vld [vmem:[%s312 + $0x190] sm:$0xff]
        %v526 = vld [vmem:[%s312 + $0x198] sm:$0xff]
        %v527 = vld [vmem:[%s312 + $0x1a0] sm:$0xff]
        %v528 = vld [vmem:[%s312 + $0x1a8] sm:$0xff]
        %v529 = vld [vmem:[%s312 + $0x1b0] sm:$0xff]
        %v530 = vld [vmem:[%s312 + $0x1b8] sm:$0xff]
        %v531 = vld [vmem:[%s312 + $0x1c0] sm:$0xff]
        %v532 = vld [vmem:[%s312 + $0x1c8] sm:$0xff]
        %v533 = vld [vmem:[%s312 + $0x1d0] sm:$0xff]
        %v534 = vld [vmem:[%s312 + $0x1d8] sm:$0xff]
        %v535 = vld [vmem:[%s312 + $0x1e0] sm:$0xff]
        %v536 = vld [vmem:[%s312 + $0x1e8] sm:$0xff]
        %v537 = vld [vmem:[%s312 + $0x1f0] sm:$0xff]
        %v538 = vld [vmem:[%s312 + $0x1f8] sm:$0xff]
        %v539 = vld [vmem:[%s3] sm:$0xff]
        %v540 = vld [vmem:[%s3 + $0x8] sm:$0xff]
        %vm541 = vcmask 130048
        %v543 = vsel %vm541, %v475, 0
        %v546 = vsel %vm541, %v476, 0
        %v549 = vsel %vm541, %v477, 0
        %v552 = vsel %vm541, %v478, 0
        %v555 = vsel %vm541, %v479, 0
        %v558 = vsel %vm541, %v480, 0
        %v561 = vsel %vm541, %v481, 0
        %v564 = vsel %vm541, %v482, 0
        %v567 = vsel %vm541, %v483, 0
        %v570 = vsel %vm541, %v484, 0
        %v573 = vsel %vm541, %v485, 0
        %v576 = vsel %vm541, %v486, 0
        %v579 = vsel %vm541, %v487, 0
        %v582 = vsel %vm541, %v488, 0
        %v585 = vsel %vm541, %v489, 0
        %v588 = vsel %vm541, %v490, 0
        %v591 = vsel %vm541, %v491, 0
        %v594 = vsel %vm541, %v492, 0
        %v597 = vsel %vm541, %v493, 0
        %v600 = vsel %vm541, %v494, 0
        %v603 = vsel %vm541, %v495, 0
        %v606 = vsel %vm541, %v496, 0
        %v609 = vsel %vm541, %v497, 0
        %v612 = vsel %vm541, %v498, 0
        %v615 = vsel %vm541, %v499, 0
        %v618 = vsel %vm541, %v500, 0
        %v621 = vsel %vm541, %v501, 0
        %v624 = vsel %vm541, %v502, 0
        %v627 = vsel %vm541, %v503, 0
        %v630 = vsel %vm541, %v504, 0
        %v633 = vsel %vm541, %v505, 0
        %v636 = vsel %vm541, %v506, 0
        %v639 = vsel %vm541, %v507, 0
        %v642 = vsel %vm541, %v508, 0
        %v645 = vsel %vm541, %v509, 0
        %v648 = vsel %vm541, %v510, 0
        %v651 = vsel %vm541, %v511, 0
        %v654 = vsel %vm541, %v512, 0
        %v657 = vsel %vm541, %v513, 0
        %v660 = vsel %vm541, %v514, 0
        %v663 = vsel %vm541, %v515, 0
        %v666 = vsel %vm541, %v516, 0
        %v669 = vsel %vm541, %v517, 0
        %v672 = vsel %vm541, %v518, 0
        %v675 = vsel %vm541, %v519, 0
        %v678 = vsel %vm541, %v520, 0
        %v681 = vsel %vm541, %v521, 0
        %v684 = vsel %vm541, %v522, 0
        %v687 = vsel %vm541, %v523, 0
        %v690 = vsel %vm541, %v524, 0
        %v693 = vsel %vm541, %v525, 0
        %v696 = vsel %vm541, %v526, 0
        %v699 = vsel %vm541, %v527, 0
        %v702 = vsel %vm541, %v528, 0
        %v705 = vsel %vm541, %v529, 0
        %v708 = vsel %vm541, %v530, 0
        %v711 = vsel %vm541, %v531, 0
        %v714 = vsel %vm541, %v532, 0
        %v717 = vsel %vm541, %v533, 0
        %v720 = vsel %vm541, %v534, 0
        %v723 = vsel %vm541, %v535, 0
        %v726 = vsel %vm541, %v536, 0
        %v729 = vsel %vm541, %v537, 0
        %v732 = vsel %vm541, %v538, 0
        %734 = vmatprep.subr.mxu0 0.0
        %735 = vmatpush1.msra.mxu0 %v539
        %736 = vmatprep.subr.mxu0 0.0
        %737 = vmatpush1.msra.mxu0 %v540
        %738 = vmatprep.subr.mxu0 0.0
        %739 = vmatpush1.msra.mxu0 0.0
        %740 = vmatprep.subr.mxu0 0.0
        %741 = vmatpush1.msra.mxu0 0.0
        %742 = vmatprep.subr.mxu0 0.0
        %743 = vmatpush1.msra.mxu0 0.0
        %744 = vmatprep.subr.mxu0 0.0
        %745 = vmatpush1.msra.mxu0 0.0
        %746 = vmatprep.subr.mxu0 0.0
        %747 = vmatpush1.msra.mxu0 0.0
        %748 = vmatprep.subr.mxu0 0.0
        %749 = vmatpush1.msra.mxu0 0.0
        %750 = vmatprep.subr.mxu0 0.0
        %751 = vmatpush1.msra.mxu0 0.0
        %752 = vmatprep.subr.mxu0 0.0
        %753 = vmatpush1.msra.mxu0 0.0
        %754 = vmatprep.subr.mxu0 0.0
        %755 = vmatpush1.msra.mxu0 0.0
        %756 = vmatprep.subr.mxu0 0.0
        %757 = vmatpush1.msra.mxu0 0.0
        %758 = vmatprep.subr.mxu0 0.0
        %759 = vmatpush1.msra.mxu0 0.0
        %760 = vmatprep.subr.mxu0 0.0
        %761 = vmatpush1.msra.mxu0 0.0
        %762 = vmatprep.subr.mxu0 0.0
        %763 = vmatpush1.msra.mxu0 0.0
        %764 = vmatprep.subr.mxu0 0.0
        %765 = vmatpush1.msra.mxu0 0.0
        %766 = vmatprep.subr.mxu0 0.0
        %767 = vmatpush1.msra.mxu0 0.0
        %768 = vmatprep.subr.mxu0 0.0
        %769 = vmatpush1.msra.mxu0 0.0
        %770 = vmatprep.subr.mxu0 0.0
        %771 = vmatpush1.msra.mxu0 0.0
        %772 = vmatprep.subr.mxu0 0.0
        %773 = vmatpush1.msra.mxu0 0.0
        %774 = vmatprep.subr.mxu0 0.0
        %775 = vmatpush1.msra.mxu0 0.0
        %776 = vmatprep.subr.mxu0 0.0
        %777 = vmatpush1.msra.mxu0 0.0
        %778 = vmatprep.subr.mxu0 0.0
        %779 = vmatpush1.msra.mxu0 0.0
        %780 = vmatprep.subr.mxu0 0.0
        %781 = vmatpush1.msra.mxu0 0.0
        %782 = vmatprep.subr.mxu0 0.0
        %783 = vmatpush1.msra.mxu0 0.0
        %784 = vmatprep.subr.mxu0 0.0
        %785 = vmatpush1.msra.mxu0 0.0
        %786 = vmatprep.subr.mxu0 0.0
        %787 = vmatpush1.msra.mxu0 0.0
        %788 = vmatprep.subr.mxu0 0.0
        %789 = vmatpush1.msra.mxu0 0.0
        %790 = vmatprep.subr.mxu0 0.0
        %791 = vmatpush1.msra.mxu0 0.0
        %792 = vmatprep.subr.mxu0 0.0
        %793 = vmatpush1.msra.mxu0 0.0
        %794 = vmatprep.subr.mxu0 0.0
        %795 = vmatpush1.msra.mxu0 0.0
        %796 = vmatprep.subr.mxu0 0.0
        %797 = vmatpush1.msra.mxu0 0.0
        %798 = vmatprep.mubr.f32.mxu0 0.0
        %799 = vmatmul.mubr.f32.gmra.mrb[0].mxu0 %v543
        %v800 = vpop.f32.mrb[0].mxu0
        %v801 = vadd.f32 0.0, %v800
        %v802 = vpop.f32.mrb[0].mxu0
        %803 = vmatprep.mubr.f32.mxu0 0.0
        %804 = vmatmul.mubr.f32.gmra.mrb[0].mxu0 %v546
        %v805 = vpop.f32.mrb[0].mxu0
        %v806 = vadd.f32 0.0, %v805
        %v807 = vpop.f32.mrb[0].mxu0
        %808 = vmatprep.mubr.f32.mxu0 0.0
        %809 = vmatmul.mubr.f32.gmra.mrb[0].mxu0 %v549
        %v810 = vpop.f32.mrb[0].mxu0
        %v811 = vadd.f32 0.0, %v810
        %v812 = vpop.f32.mrb[0].mxu0
        %813 = vmatprep.mubr.f32.mxu0 0.0
        %814 = vmatmul.mubr.f32.gmra.mrb[0].mxu0 %v552
        %v815 = vpop.f32.mrb[0].mxu0
        %v816 = vadd.f32 0.0, %v815
        %v817 = vpop.f32.mrb[0].mxu0
        %818 = vmatprep.mubr.f32.mxu0 0.0
        %819 = vmatmul.mubr.f32.gmra.mrb[0].mxu0 %v555
        %v820 = vpop.f32.mrb[0].mxu0
        %v821 = vadd.f32 0.0, %v820
        %v822 = vpop.f32.mrb[0].mxu0
        %823 = vmatprep.mubr.f32.mxu0 0.0
        %824 = vmatmul.mubr.f32.gmra.mrb[0].mxu0 %v558
        %v825 = vpop.f32.mrb[0].mxu0
        %v826 = vadd.f32 0.0, %v825
        %v827 = vpop.f32.mrb[0].mxu0
        %828 = vmatprep.mubr.f32.mxu0 0.0
        %829 = vmatmul.mubr.f32.gmra.mrb[0].mxu0 %v561
        %v830 = vpop.f32.mrb[0].mxu0
        %v831 = vadd.f32 0.0, %v830
        %v832 = vpop.f32.mrb[0].mxu0
        %833 = vmatprep.mubr.f32.mxu0 0.0
        %834 = vmatmul.mubr.f32.gmra.mrb[0].mxu0 %v564
        %v835 = vpop.f32.mrb[0].mxu0
        %v836 = vadd.f32 0.0, %v835
        %v837 = vpop.f32.mrb[0].mxu0
        %838 = vmatprep.mubr.f32.mxu0 0.0
        %839 = vmatmul.mubr.f32.gmra.mrb[0].mxu0 %v567
        %v840 = vpop.f32.mrb[0].mxu0
        %v841 = vadd.f32 0.0, %v840
        %v842 = vpop.f32.mrb[0].mxu0
        %843 = vmatprep.mubr.f32.mxu0 0.0
        %844 = vmatmul.mubr.f32.gmra.mrb[0].mxu0 %v570
        %v845 = vpop.f32.mrb[0].mxu0
        %v846 = vadd.f32 0.0, %v845
        %v847 = vpop.f32.mrb[0].mxu0
        %848 = vmatprep.mubr.f32.mxu0 0.0
        %849 = vmatmul.mubr.f32.gmra.mrb[0].mxu0 %v573
        %v850 = vpop.f32.mrb[0].mxu0
        %v851 = vadd.f32 0.0, %v850
        %v852 = vpop.f32.mrb[0].mxu0
        %853 = vmatprep.mubr.f32.mxu0 0.0
        %854 = vmatmul.mubr.f32.gmra.mrb[0].mxu0 %v576
        %v855 = vpop.f32.mrb[0].mxu0
        %v856 = vadd.f32 0.0, %v855
        %v857 = vpop.f32.mrb[0].mxu0
        %858 = vmatprep.mubr.f32.mxu0 0.0
        %859 = vmatmul.mubr.f32.gmra.mrb[0].mxu0 %v579
        %v860 = vpop.f32.mrb[0].mxu0
        %v861 = vadd.f32 0.0, %v860
        %v862 = vpop.f32.mrb[0].mxu0
        %863 = vmatprep.mubr.f32.mxu0 0.0
        %864 = vmatmul.mubr.f32.gmra.mrb[0].mxu0 %v582
        %v865 = vpop.f32.mrb[0].mxu0
        %v866 = vadd.f32 0.0, %v865
        %v867 = vpop.f32.mrb[0].mxu0
        %868 = vmatprep.mubr.f32.mxu0 0.0
        %869 = vmatmul.mubr.f32.gmra.mrb[0].mxu0 %v585
        %v870 = vpop.f32.mrb[0].mxu0
        %v871 = vadd.f32 0.0, %v870
        %v872 = vpop.f32.mrb[0].mxu0
        %873 = vmatprep.mubr.f32.mxu0 0.0
        %874 = vmatmul.mubr.f32.gmra.mrb[0].mxu0 %v588
        %v875 = vpop.f32.mrb[0].mxu0
        %v876 = vadd.f32 0.0, %v875
        %v877 = vpop.f32.mrb[0].mxu0
        %878 = vmatprep.mubr.f32.mxu0 0.0
        %879 = vmatmul.mubr.f32.gmra.mrb[0].mxu0 %v591
        %v880 = vpop.f32.mrb[0].mxu0
        %v881 = vadd.f32 0.0, %v880
        %v882 = vpop.f32.mrb[0].mxu0
        %883 = vmatprep.mubr.f32.mxu0 0.0
        %884 = vmatmul.mubr.f32.gmra.mrb[0].mxu0 %v594
        %v885 = vpop.f32.mrb[0].mxu0
        %v886 = vadd.f32 0.0, %v885
        %v887 = vpop.f32.mrb[0].mxu0
        %888 = vmatprep.mubr.f32.mxu0 0.0
        %889 = vmatmul.mubr.f32.gmra.mrb[0].mxu0 %v597
        %v890 = vpop.f32.mrb[0].mxu0
        %v891 = vadd.f32 0.0, %v890
        %v892 = vpop.f32.mrb[0].mxu0
        %893 = vmatprep.mubr.f32.mxu0 0.0
        %894 = vmatmul.mubr.f32.gmra.mrb[0].mxu0 %v600
        %v895 = vpop.f32.mrb[0].mxu0
        %v896 = vadd.f32 0.0, %v895
        %v897 = vpop.f32.mrb[0].mxu0
        %898 = vmatprep.mubr.f32.mxu0 0.0
        %899 = vmatmul.mubr.f32.gmra.mrb[0].mxu0 %v603
        %v900 = vpop.f32.mrb[0].mxu0
        %v901 = vadd.f32 0.0, %v900
        %v902 = vpop.f32.mrb[0].mxu0
        %903 = vmatprep.mubr.f32.mxu0 0.0
        %904 = vmatmul.mubr.f32.gmra.mrb[0].mxu0 %v606
        %v905 = vpop.f32.mrb[0].mxu0
        %v906 = vadd.f32 0.0, %v905
        %v907 = vpop.f32.mrb[0].mxu0
        %908 = vmatprep.mubr.f32.mxu0 0.0
        %909 = vmatmul.mubr.f32.gmra.mrb[0].mxu0 %v609
        %v910 = vpop.f32.mrb[0].mxu0
        %v911 = vadd.f32 0.0, %v910
        %v912 = vpop.f32.mrb[0].mxu0
        %913 = vmatprep.mubr.f32.mxu0 0.0
        %914 = vmatmul.mubr.f32.gmra.mrb[0].mxu0 %v612
        %v915 = vpop.f32.mrb[0].mxu0
        %v916 = vadd.f32 0.0, %v915
        %v917 = vpop.f32.mrb[0].mxu0
        %918 = vmatprep.mubr.f32.mxu0 0.0
        %919 = vmatmul.mubr.f32.gmra.mrb[0].mxu0 %v615
        %v920 = vpop.f32.mrb[0].mxu0
        %v921 = vadd.f32 0.0, %v920
        %v922 = vpop.f32.mrb[0].mxu0
        %923 = vmatprep.mubr.f32.mxu0 0.0
        %924 = vmatmul.mubr.f32.gmra.mrb[0].mxu0 %v618
        %v925 = vpop.f32.mrb[0].mxu0
        %v926 = vadd.f32 0.0, %v925
        %v927 = vpop.f32.mrb[0].mxu0
        %928 = vmatprep.mubr.f32.mxu0 0.0
        %929 = vmatmul.mubr.f32.gmra.mrb[0].mxu0 %v621
        %v930 = vpop.f32.mrb[0].mxu0
        %v931 = vadd.f32 0.0, %v930
        %v932 = vpop.f32.mrb[0].mxu0
        %933 = vmatprep.mubr.f32.mxu0 0.0
        %934 = vmatmul.mubr.f32.gmra.mrb[0].mxu0 %v624
        %v935 = vpop.f32.mrb[0].mxu0
        %v936 = vadd.f32 0.0, %v935
        %v937 = vpop.f32.mrb[0].mxu0
        %938 = vmatprep.mubr.f32.mxu0 0.0
        %939 = vmatmul.mubr.f32.gmra.mrb[0].mxu0 %v627
        %v940 = vpop.f32.mrb[0].mxu0
        %v941 = vadd.f32 0.0, %v940
        %v942 = vpop.f32.mrb[0].mxu0
        %943 = vmatprep.mubr.f32.mxu0 0.0
        %944 = vmatmul.mubr.f32.gmra.mrb[0].mxu0 %v630
        %v945 = vpop.f32.mrb[0].mxu0
        %v946 = vadd.f32 0.0, %v945
        %v947 = vpop.f32.mrb[0].mxu0
        %948 = vmatprep.mubr.f32.mxu0 0.0
        %949 = vmatmul.mubr.f32.gmra.mrb[0].mxu0 %v633
        %v950 = vpop.f32.mrb[0].mxu0
        %v951 = vadd.f32 0.0, %v950
        %v952 = vpop.f32.mrb[0].mxu0
        %953 = vmatprep.mubr.f32.mxu0 0.0
        %954 = vmatmul.mubr.f32.gmra.mrb[0].mxu0 %v636
        %v955 = vpop.f32.mrb[0].mxu0
        %v956 = vadd.f32 0.0, %v955
        %v957 = vpop.f32.mrb[0].mxu0
        %958 = vmatprep.mubr.f32.mxu0 0.0
        %959 = vmatmul.mubr.f32.gmra.mrb[0].mxu0 %v639
        %v960 = vpop.f32.mrb[0].mxu0
        %v961 = vadd.f32 0.0, %v960
        %v962 = vpop.f32.mrb[0].mxu0
        %963 = vmatprep.mubr.f32.mxu0 0.0
        %964 = vmatmul.mubr.f32.gmra.mrb[0].mxu0 %v642
        %v965 = vpop.f32.mrb[0].mxu0
        %v966 = vadd.f32 0.0, %v965
        %v967 = vpop.f32.mrb[0].mxu0
        %968 = vmatprep.mubr.f32.mxu0 0.0
        %969 = vmatmul.mubr.f32.gmra.mrb[0].mxu0 %v645
        %v970 = vpop.f32.mrb[0].mxu0
        %v971 = vadd.f32 0.0, %v970
        %v972 = vpop.f32.mrb[0].mxu0
        %973 = vmatprep.mubr.f32.mxu0 0.0
        %974 = vmatmul.mubr.f32.gmra.mrb[0].mxu0 %v648
        %v975 = vpop.f32.mrb[0].mxu0
        %v976 = vadd.f32 0.0, %v975
        %v977 = vpop.f32.mrb[0].mxu0
        %978 = vmatprep.mubr.f32.mxu0 0.0
        %979 = vmatmul.mubr.f32.gmra.mrb[0].mxu0 %v651
        %v980 = vpop.f32.mrb[0].mxu0
        %v981 = vadd.f32 0.0, %v980
        %v982 = vpop.f32.mrb[0].mxu0
        %983 = vmatprep.mubr.f32.mxu0 0.0
        %984 = vmatmul.mubr.f32.gmra.mrb[0].mxu0 %v654
        %v985 = vpop.f32.mrb[0].mxu0
        %v986 = vadd.f32 0.0, %v985
        %v987 = vpop.f32.mrb[0].mxu0
        %988 = vmatprep.mubr.f32.mxu0 0.0
        %989 = vmatmul.mubr.f32.gmra.mrb[0].mxu0 %v657
        %v990 = vpop.f32.mrb[0].mxu0
        %v991 = vadd.f32 0.0, %v990
        %v992 = vpop.f32.mrb[0].mxu0
        %993 = vmatprep.mubr.f32.mxu0 0.0
        %994 = vmatmul.mubr.f32.gmra.mrb[0].mxu0 %v660
        %v995 = vpop.f32.mrb[0].mxu0
        %v996 = vadd.f32 0.0, %v995
        %v997 = vpop.f32.mrb[0].mxu0
        %998 = vmatprep.mubr.f32.mxu0 0.0
        %999 = vmatmul.mubr.f32.gmra.mrb[0].mxu0 %v663
        %v1000 = vpop.f32.mrb[0].mxu0
        %v1001 = vadd.f32 0.0, %v1000
        %v1002 = vpop.f32.mrb[0].mxu0
        %1003 = vmatprep.mubr.f32.mxu0 0.0
        %1004 = vmatmul.mubr.f32.gmra.mrb[0].mxu0 %v666
        %v1005 = vpop.f32.mrb[0].mxu0
        %v1006 = vadd.f32 0.0, %v1005
        %v1007 = vpop.f32.mrb[0].mxu0
        %1008 = vmatprep.mubr.f32.mxu0 0.0
        %1009 = vmatmul.mubr.f32.gmra.mrb[0].mxu0 %v669
        %v1010 = vpop.f32.mrb[0].mxu0
        %v1011 = vadd.f32 0.0, %v1010
        %v1012 = vpop.f32.mrb[0].mxu0
        %1013 = vmatprep.mubr.f32.mxu0 0.0
        %1014 = vmatmul.mubr.f32.gmra.mrb[0].mxu0 %v672
        %v1015 = vpop.f32.mrb[0].mxu0
        %v1016 = vadd.f32 0.0, %v1015
        %v1017 = vpop.f32.mrb[0].mxu0
        %1018 = vmatprep.mubr.f32.mxu0 0.0
        %1019 = vmatmul.mubr.f32.gmra.mrb[0].mxu0 %v675
        %v1020 = vpop.f32.mrb[0].mxu0
        %v1021 = vadd.f32 0.0, %v1020
        %v1022 = vpop.f32.mrb[0].mxu0
        %1023 = vmatprep.mubr.f32.mxu0 0.0
        %1024 = vmatmul.mubr.f32.gmra.mrb[0].mxu0 %v678
        %v1025 = vpop.f32.mrb[0].mxu0
        %v1026 = vadd.f32 0.0, %v1025
        %v1027 = vpop.f32.mrb[0].mxu0
        %1028 = vmatprep.mubr.f32.mxu0 0.0
        %1029 = vmatmul.mubr.f32.gmra.mrb[0].mxu0 %v681
        %v1030 = vpop.f32.mrb[0].mxu0
        %v1031 = vadd.f32 0.0, %v1030
        %v1032 = vpop.f32.mrb[0].mxu0
        %1033 = vmatprep.mubr.f32.mxu0 0.0
        %1034 = vmatmul.mubr.f32.gmra.mrb[0].mxu0 %v684
        %v1035 = vpop.f32.mrb[0].mxu0
        %v1036 = vadd.f32 0.0, %v1035
        %v1037 = vpop.f32.mrb[0].mxu0
        %1038 = vmatprep.mubr.f32.mxu0 0.0
        %1039 = vmatmul.mubr.f32.gmra.mrb[0].mxu0 %v687
        %v1040 = vpop.f32.mrb[0].mxu0
        %v1041 = vadd.f32 0.0, %v1040
        %v1042 = vpop.f32.mrb[0].mxu0
        %1043 = vmatprep.mubr.f32.mxu0 0.0
        %1044 = vmatmul.mubr.f32.gmra.mrb[0].mxu0 %v690
        %v1045 = vpop.f32.mrb[0].mxu0
        %v1046 = vadd.f32 0.0, %v1045
        %v1047 = vpop.f32.mrb[0].mxu0
        %1048 = vmatprep.mubr.f32.mxu0 0.0
        %1049 = vmatmul.mubr.f32.gmra.mrb[0].mxu0 %v693
        %v1050 = vpop.f32.mrb[0].mxu0
        %v1051 = vadd.f32 0.0, %v1050
        %v1052 = vpop.f32.mrb[0].mxu0
        %1053 = vmatprep.mubr.f32.mxu0 0.0
        %1054 = vmatmul.mubr.f32.gmra.mrb[0].mxu0 %v696
        %v1055 = vpop.f32.mrb[0].mxu0
        %v1056 = vadd.f32 0.0, %v1055
        %v1057 = vpop.f32.mrb[0].mxu0
        %1058 = vmatprep.mubr.f32.mxu0 0.0
        %1059 = vmatmul.mubr.f32.gmra.mrb[0].mxu0 %v699
        %v1060 = vpop.f32.mrb[0].mxu0
        %v1061 = vadd.f32 0.0, %v1060
        %v1062 = vpop.f32.mrb[0].mxu0
        %1063 = vmatprep.mubr.f32.mxu0 0.0
        %1064 = vmatmul.mubr.f32.gmra.mrb[0].mxu0 %v702
        %v1065 = vpop.f32.mrb[0].mxu0
        %v1066 = vadd.f32 0.0, %v1065
        %v1067 = vpop.f32.mrb[0].mxu0
        %1068 = vmatprep.mubr.f32.mxu0 0.0
        %1069 = vmatmul.mubr.f32.gmra.mrb[0].mxu0 %v705
        %v1070 = vpop.f32.mrb[0].mxu0
        %v1071 = vadd.f32 0.0, %v1070
        %v1072 = vpop.f32.mrb[0].mxu0
        %1073 = vmatprep.mubr.f32.mxu0 0.0
        %1074 = vmatmul.mubr.f32.gmra.mrb[0].mxu0 %v708
        %v1075 = vpop.f32.mrb[0].mxu0
        %v1076 = vadd.f32 0.0, %v1075
        %v1077 = vpop.f32.mrb[0].mxu0
        %1078 = vmatprep.mubr.f32.mxu0 0.0
        %1079 = vmatmul.mubr.f32.gmra.mrb[0].mxu0 %v711
        %v1080 = vpop.f32.mrb[0].mxu0
        %v1081 = vadd.f32 0.0, %v1080
        %v1082 = vpop.f32.mrb[0].mxu0
        %1083 = vmatprep.mubr.f32.mxu0 0.0
        %1084 = vmatmul.mubr.f32.gmra.mrb[0].mxu0 %v714
        %v1085 = vpop.f32.mrb[0].mxu0
        %v1086 = vadd.f32 0.0, %v1085
        %v1087 = vpop.f32.mrb[0].mxu0
        %1088 = vmatprep.mubr.f32.mxu0 0.0
        %1089 = vmatmul.mubr.f32.gmra.mrb[0].mxu0 %v717
        %v1090 = vpop.f32.mrb[0].mxu0
        %v1091 = vadd.f32 0.0, %v1090
        %v1092 = vpop.f32.mrb[0].mxu0
        %1093 = vmatprep.mubr.f32.mxu0 0.0
        %1094 = vmatmul.mubr.f32.gmra.mrb[0].mxu0 %v720
        %v1095 = vpop.f32.mrb[0].mxu0
        %v1096 = vadd.f32 0.0, %v1095
        %v1097 = vpop.f32.mrb[0].mxu0
        %1098 = vmatprep.mubr.f32.mxu0 0.0
        %1099 = vmatmul.mubr.f32.gmra.mrb[0].mxu0 %v723
        %v1100 = vpop.f32.mrb[0].mxu0
        %v1101 = vadd.f32 0.0, %v1100
        %v1102 = vpop.f32.mrb[0].mxu0
        %1103 = vmatprep.mubr.f32.mxu0 0.0
        %1104 = vmatmul.mubr.f32.gmra.mrb[0].mxu0 %v726
        %v1105 = vpop.f32.mrb[0].mxu0
        %v1106 = vadd.f32 0.0, %v1105
        %v1107 = vpop.f32.mrb[0].mxu0
        %1108 = vmatprep.mubr.f32.mxu0 0.0
        %1109 = vmatmul.mubr.f32.gmra.mrb[0].mxu0 %v729
        %v1110 = vpop.f32.mrb[0].mxu0
        %v1111 = vadd.f32 0.0, %v1110
        %v1112 = vpop.f32.mrb[0].mxu0
        %1113 = vmatprep.mubr.f32.mxu0 0.0
        %1114 = vmatmul.mubr.f32.gmra.mrb[0].mxu0 %v732
        %v1115 = vpop.f32.mrb[0].mxu0
        %v1116 = vadd.f32 0.0, %v1115
        %v1117 = vpop.f32.mrb[0].mxu0
        %1118 = vdwg.mxu0
        %v1119 = vmax.f32 %v801, %v841
        %v1120 = vmax.f32 %v806, %v846
        %v1121 = vmax.f32 %v811, %v851
        %v1122 = vmax.f32 %v816, %v856
        %v1123 = vmax.f32 %v821, %v861
        %v1124 = vmax.f32 %v826, %v866
        %v1125 = vmax.f32 %v831, %v871
        %v1126 = vmax.f32 %v836, %v876
        %v1127 = vmax.f32 %v1119, %v881
        %v1128 = vmax.f32 %v1120, %v886
        %v1129 = vmax.f32 %v1121, %v891
        %v1130 = vmax.f32 %v1122, %v896
        %v1131 = vmax.f32 %v1123, %v901
        %v1132 = vmax.f32 %v1124, %v906
        %v1133 = vmax.f32 %v1125, %v911
        %v1134 = vmax.f32 %v1126, %v916
        %v1135 = vmax.f32 %v1127, %v921
        %v1136 = vmax.f32 %v1128, %v926
        %v1137 = vmax.f32 %v1129, %v931
        %v1138 = vmax.f32 %v1130, %v936
        %v1139 = vmax.f32 %v1131, %v941
        %v1140 = vmax.f32 %v1132, %v946
        %v1141 = vmax.f32 %v1133, %v951
        %v1142 = vmax.f32 %v1134, %v956
        %v1143 = vmax.f32 %v1135, %v961
        %v1144 = vmax.f32 %v1136, %v966
        %v1145 = vmax.f32 %v1137, %v971
        %v1146 = vmax.f32 %v1138, %v976
        %v1147 = vmax.f32 %v1139, %v981
        %v1148 = vmax.f32 %v1140, %v986
        %v1149 = vmax.f32 %v1141, %v991
        %v1150 = vmax.f32 %v1142, %v996
        %v1151 = vmax.f32 %v1143, %v1001
        %v1152 = vmax.f32 %v1144, %v1006
        %v1153 = vmax.f32 %v1145, %v1011
        %v1154 = vmax.f32 %v1146, %v1016
        %v1155 = vmax.f32 %v1147, %v1021
        %v1156 = vmax.f32 %v1148, %v1026
        %v1157 = vmax.f32 %v1149, %v1031
        %v1158 = vmax.f32 %v1150, %v1036
        %v1159 = vmax.f32 %v1151, %v1041
        %v1160 = vmax.f32 %v1152, %v1046
        %v1161 = vmax.f32 %v1153, %v1051
        %v1162 = vmax.f32 %v1154, %v1056
        %v1163 = vmax.f32 %v1155, %v1061
        %v1164 = vmax.f32 %v1156, %v1066
        %v1165 = vmax.f32 %v1157, %v1071
        %v1166 = vmax.f32 %v1158, %v1076
        %v1167 = vmax.f32 %v1159, %v1081
        %v1168 = vmax.f32 %v1160, %v1086
        %v1169 = vmax.f32 %v1161, %v1091
        %v1170 = vmax.f32 %v1162, %v1096
        %v1171 = vmax.f32 %v1163, %v1101
        %v1172 = vmax.f32 %v1164, %v1106
        %v1173 = vmax.f32 %v1165, %v1111
        %v1174 = vmax.f32 %v1166, %v1116
        // Predicated region
        $region45: #{tpu_custom_call.1} parent=39 // pred_check
          %p1175 = pneg %p316
        $region46: #{tpu_custom_call.1} parent=39 // pred_check_branch
          %1177 = sbr.rel (%p1175) target = $region48
        $region47: #{tpu_custom_call.1} parent=39 // pred_region
          %1178 = vst [vmem:[#allocation2] sm:$0xff] %v1167
          %1179 = vst [vmem:[#allocation2 + $0x8] sm:$0xff] %v1168
          %1180 = vst [vmem:[#allocation2 + $0x10] sm:$0xff] %v1169
          %1181 = vst [vmem:[#allocation2 + $0x18] sm:$0xff] %v1170
          %1182 = vst [vmem:[#allocation2 + $0x20] sm:$0xff] %v1171
          %1183 = vst [vmem:[#allocation2 + $0x28] sm:$0xff] %v1172
          %1184 = vst [vmem:[#allocation2 + $0x30] sm:$0xff] %v1173
          %1185 = vst [vmem:[#allocation2 + $0x38] sm:$0xff] %v1174
        $region48: #{tpu_custom_call.1} parent=39 // pred_fallthru
          _
        %p1186 = scmp.gt.s32.totalorder %s26, 0
        // Predicated region
        $region49: #{tpu_custom_call.1} parent=39 // pred_check
          %p1187 = pneg %p1186
        $region50: #{tpu_custom_call.1} parent=39 // pred_check_branch
          %1189 = sbr.rel (%p1187) target = $region52
        $region51: #{tpu_custom_call.1} parent=39 // pred_region
          %v1190 = vld [vmem:[#allocation2] sm:$0xff]
          %v1191 = vld [vmem:[#allocation2 + $0x8] sm:$0xff]
          %v1192 = vld [vmem:[#allocation2 + $0x10] sm:$0xff]
          %v1193 = vld [vmem:[#allocation2 + $0x18] sm:$0xff]
          %v1194 = vld [vmem:[#allocation2 + $0x20] sm:$0xff]
          %v1195 = vld [vmem:[#allocation2 + $0x28] sm:$0xff]
          %v1196 = vld [vmem:[#allocation2 + $0x30] sm:$0xff]
          %v1197 = vld [vmem:[#allocation2 + $0x38] sm:$0xff]
          %v1198 = vmax.f32 %v1190, %v1167
          %v1199 = vmax.f32 %v1191, %v1168
          %v1200 = vmax.f32 %v1192, %v1169
          %v1201 = vmax.f32 %v1193, %v1170
          %v1202 = vmax.f32 %v1194, %v1171
          %v1203 = vmax.f32 %v1195, %v1172
          %v1204 = vmax.f32 %v1196, %v1173
          %v1205 = vmax.f32 %v1197, %v1174
          %1206 = vst [vmem:[#allocation2] sm:$0xff] %v1198
          %1207 = vst [vmem:[#allocation2 + $0x8] sm:$0xff] %v1199
          %1208 = vst [vmem:[#allocation2 + $0x10] sm:$0xff] %v1200
          %1209 = vst [vmem:[#allocation2 + $0x18] sm:$0xff] %v1201
          %1210 = vst [vmem:[#allocation2 + $0x20] sm:$0xff] %v1202
          %1211 = vst [vmem:[#allocation2 + $0x28] sm:$0xff] %v1203
          %1212 = vst [vmem:[#allocation2 + $0x30] sm:$0xff] %v1204
          %1213 = vst [vmem:[#allocation2 + $0x38] sm:$0xff] %v1205
        $region52: #{tpu_custom_call.1} parent=39 // pred_fallthru
          _
        %p1214 = scmp.eq.s32.totalorder %s26, 1
        // Predicated region
        $region53: #{tpu_custom_call.1} parent=39 // pred_check
          %p1215 = pneg %p1214
        $region54: #{tpu_custom_call.1} parent=39 // pred_check_branch
          %1217 = sbr.rel (%p1215) target = $region56
        $region55: #{tpu_custom_call.1} parent=39 // pred_region
          %v1218 = vld [vmem:[#allocation2] sm:$0xff]
          %v1219 = vld [vmem:[#allocation2 + $0x8] sm:$0xff]
          %v1220 = vld [vmem:[#allocation2 + $0x10] sm:$0xff]
          %v1221 = vld [vmem:[#allocation2 + $0x18] sm:$0xff]
          %v1222 = vld [vmem:[#allocation2 + $0x20] sm:$0xff]
          %v1223 = vld [vmem:[#allocation2 + $0x28] sm:$0xff]
          %v1224 = vld [vmem:[#allocation2 + $0x30] sm:$0xff]
          %v1225 = vld [vmem:[#allocation2 + $0x38] sm:$0xff]
          %v1226 = vld [vmem:[#allocation3] sm:$0xff]
          %v1227 = vld [vmem:[#allocation3 + $0x8] sm:$0xff]
          %v1228 = vld [vmem:[#allocation3 + $0x10] sm:$0xff]
          %v1229 = vld [vmem:[#allocation3 + $0x18] sm:$0xff]
          %v1230 = vld [vmem:[#allocation3 + $0x20] sm:$0xff]
          %v1231 = vld [vmem:[#allocation3 + $0x28] sm:$0xff]
          %v1232 = vld [vmem:[#allocation3 + $0x30] sm:$0xff]
          %v1233 = vld [vmem:[#allocation3 + $0x38] sm:$0xff]
          %v1234 = vadd.f32 %v1218, %v1226
          %v1235 = vadd.f32 %v1219, %v1227
          %v1236 = vadd.f32 %v1220, %v1228
          %v1237 = vadd.f32 %v1221, %v1229
          %v1238 = vadd.f32 %v1222, %v1230
          %v1239 = vadd.f32 %v1223, %v1231
          %v1240 = vadd.f32 %v1224, %v1232
          %v1241 = vadd.f32 %v1225, %v1233
          %v1242 = vmax.f32 %v1234, 0.0
          %v1243 = vmax.f32 %v1235, 0.0
          %v1244 = vmax.f32 %v1236, 0.0
          %v1245 = vmax.f32 %v1237, 0.0
          %v1246 = vmax.f32 %v1238, 0.0
          %v1247 = vmax.f32 %v1239, 0.0
          %v1248 = vmax.f32 %v1240, 0.0
          %v1249 = vmax.f32 %v1241, 0.0
          %1250 = vst [vmem:[%s288] sm:$0xff] %v1242
          %1251 = vst [vmem:[%s288 + $0x8] sm:$0xff] %v1243
          %1252 = vst [vmem:[%s288 + $0x10] sm:$0xff] %v1244
          %1253 = vst [vmem:[%s288 + $0x18] sm:$0xff] %v1245
          %1254 = vst [vmem:[%s288 + $0x20] sm:$0xff] %v1246
          %1255 = vst [vmem:[%s288 + $0x28] sm:$0xff] %v1247
          %1256 = vst [vmem:[%s288 + $0x30] sm:$0xff] %v1248
          %1257 = vst [vmem:[%s288 + $0x38] sm:$0xff] %v1249
        $region56: #{tpu_custom_call.1} parent=39 // pred_fallthru
          _
        %s1258 = sand.u32 %s169, 1
        %s1259 = scalar_lea.sflag [#allocation5], %s1258
        %s1260 = sand.u32 %s169, 1
        %s1261 = smul.addr %s1260, 64
        %s1262 = scalar_lea.vmem [#allocation4], %s1261
        // Predicated region
        $region57: #{tpu_custom_call.1} parent=39 // pred_check
          %p1263 = pneg %p179
        $region58: #{tpu_custom_call.1} parent=39 // pred_check_branch
          %1265 = sbr.rel (%p1263) target = $region60
        $region59: #{tpu_custom_call.1} parent=39 // pred_region
          %s1266 = smul.u32 8, %s25
          %s1268 = ssub.s32 1024, 1024
          %1269 = vsyncadd %s1259, %s1268
          %s1270 = smul.addr %s24, 8
          %s1271 = sadd.s32 %s1266, %s1270
          %s1272 = smul.addr %s1271, 128
          %s1273 = scalar_lea.hbm %s5, %s1272
          %s1274 = sshll.u32 %s1262, 4
          %s1275 = int_to_ptr.vmem [resolvable:$true] %s1274
          %1280 = dma.vmem_to_hbm [thread:$0]  %s1275, 1024, %s1273, %s1259, 128, 128, 8
        $region60: #{tpu_custom_call.1} parent=39 // pred_fallthru
          _
      $region40: #{tpu_custom_call.1} parent=5 // pred_fallthru
        _
      %p1281 = scmp.le.s32.totalorder 2, %s14
      // Predicated region
      $region61: #{tpu_custom_call.1} parent=5 // pred_check
        %p1282 = pneg %p1281
      $region62: #{tpu_custom_call.1} parent=5 // pred_check_branch
        %1284 = sbr.rel (%p1282) target = $region64
      $region63: #{tpu_custom_call.1} parent=5 // pred_region
        %s1285 = ssub.s32 %s14, 2
        // Predicated region
        $region65: #{tpu_custom_call.1} parent=63 // pred_check
          %p1286 = pneg %p185
        $region66: #{tpu_custom_call.1} parent=63 // pred_check_branch
          %1288 = sbr.rel (%p1286) target = $region68
        $region67: #{tpu_custom_call.1} parent=63 // pred_region
          %s1289 = sand.u32 %s170, 1
          %s1290 = scalar_lea.sflag [#allocation5], %s1289
          %s1291 = sand.u32 %s170, 1
          %s1292 = smul.addr %s1291, 64
          %s1293 = scalar_lea.vmem [#allocation4], %s1292
          %1294 = dma.done %s1290, 1024
        $region68: #{tpu_custom_call.1} parent=63 // pred_fallthru
          _
      $region64: #{tpu_custom_call.1} parent=5 // pred_fallthru
        _
    $region6: #{tpu_custom_call.1} parent=1 // loop_footer
      %s18 = sadd.s32 1, %s14
    $region7: #{tpu_custom_call.1} parent=1 // loop_footer_branch
      %13 = sbr.rel target = $region3
    $region8: #{tpu_custom_call.1} parent=1 // loop_exit
      _
    %1295 = vsyncpa [#allocation5], 1
    %s1296 = scalar_lea.sflag [#allocation5], 1
    %1297 = vsyncpa %s1296, 1

</llo_original>
